<compile_context>
chip_gen: v6e
topology: v6e:2x2x1
jax: 0.10.0
libtpu: 0.0.40
codegen_flags: <defaults>
</compile_context>

<pallas_src>
import functools
import math

import jax
import jax.numpy as jnp
from jax.experimental import pallas as pl
from jax.experimental.pallas import tpu as pltpu

_LANES = 128
_OUT_SUBLANES = 8


def _bingham_log_prob(q0, q1, q2, q3, g0, g1, g2, g3, z1, z2, z3):
    """Elementwise Bingham log-density with Laplace-approximated normalizer."""
    # Orthogonal directions to the mode quaternion (columns of the left
    # quaternion-multiplication matrix; the mode itself carries z=0).
    d1 = -q1 * g0 + q0 * g1 + q3 * g2 - q2 * g3
    d2 = -q2 * g0 - q3 * g1 + q0 * g2 + q1 * g3
    d3 = -q3 * g0 + q2 * g1 - q1 * g2 + q0 * g3
    expo = z1 * d1 * d1 + z2 * d2 * d2 + z3 * d3 * d3
    # Single fused log (1 EUP op instead of 3).
    nz = (jnp.maximum(-z1, 1e-6) * jnp.maximum(-z2, 1e-6) * jnp.maximum(-z3, 1e-6))
    log_f = 1.5 * math.log(math.pi) - 0.5 * jnp.log(nz)
    return expo - log_f


def _rwta_mb_kernel(pq_ref, gt_ref, z_ref, w_ref, out_ref, *, batch, use_l1):
    # pq_ref : (4, nm, Rt, 128)   quaternion components of the predictions
    # gt_ref : (4, Rt, 128)       ground-truth quaternion (NOT broadcast over nm)
    # z_ref  : (3, nm, Rt, 128)   Bingham concentrations
    # w_ref  : (nm, Rt, 128)      mixture logits
    # out_ref: (1, 3, 8, 128)     per-tile partial sums (sum_p, sum_selected, sum_lse)
    nm = w_ref.shape[0]
    block_rows = gt_ref.shape[1]

    g0, g1, g2, g3 = gt_ref[0], gt_ref[1], gt_ref[2], gt_ref[3]

    # Validity mask for the padded batch tail.
    rows = jax.lax.broadcasted_iota(jnp.int32, (block_rows, _LANES), 0)
    lanes = jax.lax.broadcasted_iota(jnp.int32, (block_rows, _LANES), 1)
    gidx = (pl.program_id(0) * block_rows + rows) * _LANES + lanes
    valid = gidx < batch

    # Per-component slabs (unrolled over the small static nm).
    p_list, w_list, l1_list = [], [], []
    for m in range(nm):
        q0, q1, q2, q3 = pq_ref[0, m], pq_ref[1, m], pq_ref[2, m], pq_ref[3, m]
        z1, z2, z3 = z_ref[0, m], z_ref[1, m], z_ref[2, m]
        p_list.append(_bingham_log_prob(q0, q1, q2, q3, g0, g1, g2, g3, z1, z2, z3))
        w_list.append(w_ref[m])
        if use_l1:
            l1_list.append(jnp.abs(q0 - g0) + jnp.abs(q1 - g1)
                           + jnp.abs(q2 - g2) + jnp.abs(q3 - g3))

    # sum over mixture components (unrolled VPU adds).
    sum_p = p_list[0]
    for m in range(1, nm):
        sum_p = sum_p + p_list[m]

    # winner-take-all selection.
    if use_l1:
        best_l1 = l1_list[0]
        selected = p_list[0]
        for m in range(1, nm):
            take = l1_list[m] < best_l1        # strict < -> first-occurrence tie-break
            best_l1 = jnp.where(take, l1_list[m], best_l1)
            selected = jnp.where(take, p_list[m], selected)
    else:
        selected = p_list[0]
        for m in range(1, nm):
            selected = jnp.maximum(selected, p_list[m])

    # mb term: logsumexp_m(w + p) - logsumexp_m(w)  (== logsumexp(log_softmax(w) + p)).
    t_list = [w_list[m] + p_list[m] for m in range(nm)]
    t_max = t_list[0]
    w_max = w_list[0]
    for m in range(1, nm):
        t_max = jnp.maximum(t_max, t_list[m])
        w_max = jnp.maximum(w_max, w_list[m])
    t_sum = jnp.exp(t_list[0] - t_max)
    w_sum = jnp.exp(w_list[0] - w_max)
    for m in range(1, nm):
        t_sum = t_sum + jnp.exp(t_list[m] - t_max)
        w_sum = w_sum + jnp.exp(w_list[m] - w_max)
    lse = (t_max + jnp.log(t_sum)) - (w_max + jnp.log(w_sum))

    zero = jnp.float32(0.0)
    part_sum_p = jnp.sum(jnp.where(valid, sum_p, zero))
    part_sum_sel = jnp.sum(jnp.where(valid, selected, zero))
    part_sum_lse = jnp.sum(jnp.where(valid, lse, zero))

    out_ref[0, 0] = jnp.broadcast_to(part_sum_p, (_OUT_SUBLANES, _LANES))
    out_ref[0, 1] = jnp.broadcast_to(part_sum_sel, (_OUT_SUBLANES, _LANES))
    out_ref[0, 2] = jnp.broadcast_to(part_sum_lse, (_OUT_SUBLANES, _LANES))


def rwta_mb_loss(pred_q, Zbatch, weights, gt_q, *, nm, epsilon=0.95,
                 use_l1=False, block_rows=32):
    """pred_q: (B, nm, 4), Zbatch: (B, nm, 3), weights: (B, nm), gt_q: (B, 4)."""
    B = pred_q.shape[0]
    pred_q = pred_q.reshape(B, nm, 4).astype(jnp.float32)
    Zbatch = Zbatch.reshape(B, nm, 3).astype(jnp.float32)
    weights = weights.reshape(B, nm).astype(jnp.float32)
    gt_q = gt_q.reshape(B, 4).astype(jnp.float32)

    tile = block_rows * _LANES
    num_tiles = pl.cdiv(B, tile)
    B_pad = num_tiles * tile
    R = B_pad // _LANES
    pad = B_pad - B

    # Component-major, batch-dense layout (batch on the last two (rows, 128) dims).
    pq = jnp.pad(jnp.transpose(pred_q, (2, 1, 0)), ((0, 0), (0, 0), (0, pad)))
    pq = pq.reshape(4, nm, R, _LANES)
    gt = jnp.pad(jnp.transpose(gt_q, (1, 0)), ((0, 0), (0, pad)))
    gt = gt.reshape(4, R, _LANES)
    z = jnp.pad(jnp.transpose(Zbatch, (2, 1, 0)), ((0, 0), (0, 0), (0, pad)))
    z = z.reshape(3, nm, R, _LANES)
    w = jnp.pad(jnp.transpose(weights, (1, 0)), ((0, 0), (0, pad)))
    w = w.reshape(nm, R, _LANES)

    kernel = functools.partial(_rwta_mb_kernel, batch=B, use_l1=use_l1)
    partials = pl.pallas_call(
        kernel,
        out_shape=jax.ShapeDtypeStruct((num_tiles, 3, _OUT_SUBLANES, _LANES),
                                       jnp.float32),
        grid=(num_tiles,),
        in_specs=[
            pl.BlockSpec((4, nm, block_rows, _LANES), lambda i: (0, 0, i, 0)),
            pl.BlockSpec((4, block_rows, _LANES), lambda i: (0, i, 0)),
            pl.BlockSpec((3, nm, block_rows, _LANES), lambda i: (0, 0, i, 0)),
            pl.BlockSpec((nm, block_rows, _LANES), lambda i: (0, i, 0)),
        ],
        out_specs=pl.BlockSpec((1, 3, _OUT_SUBLANES, _LANES),
                               lambda i: (i, 0, 0, 0)),
        compiler_params=pltpu.CompilerParams(dimension_semantics=("parallel",)),
    )(pq, gt, z, w)

    sums = jnp.sum(partials[:, :, 0, 0], axis=0)        # (3,)
    sum_p, sum_sel, sum_lse = sums[0], sums[1], sums[2]

    all_assignments = -sum_p / (B * nm)
    best_assignment = -sum_sel / B
    rwta = ((epsilon - 1.0 / nm) * best_assignment
            + (1.0 - epsilon) * (1.0 / nm) * all_assignments)
    mb = -sum_lse / B
    return rwta, mb


def _reference_jnp(pred_q, Zbatch, weights, gt_q, *, nm, epsilon=0.95, use_l1=False):
    """Pure-JAX mirror of the torch forward (same Bingham approximation)."""
    B = pred_q.shape[0]
    pq = pred_q.reshape(-1, 4).astype(jnp.float32)
    gt = jnp.broadcast_to(gt_q.reshape(-1, 1, 4), (B, nm, 4)).reshape(-1, 4)
    gt = gt.astype(jnp.float32)
    z = Zbatch.reshape(-1, 3).astype(jnp.float32)
    weights = weights.reshape(-1, nm).astype(jnp.float32)
    p = _bingham_log_prob(pq[:, 0], pq[:, 1], pq[:, 2], pq[:, 3],
                          gt[:, 0], gt[:, 1], gt[:, 2], gt[:, 3],
                          z[:, 0], z[:, 1], z[:, 2]).reshape(-1, nm)
    if use_l1:
        l1 = jnp.abs(pq - gt).sum(-1).reshape(-1, nm)
        best = jnp.argmin(l1, axis=1)
    else:
        best = jnp.argmax(p, axis=1)
    all_assignments = -jnp.mean(p)
    best_assignment = -jnp.mean(p[jnp.arange(p.shape[0]), best])
    rwta = ((epsilon - 1.0 / nm) * best_assignment
            + (1.0 - epsilon) * (1.0 / nm) * all_assignments)
    w = jax.nn.softmax(weights, axis=-1)
    mb = -jnp.mean(jax.scipy.special.logsumexp(jnp.log(w) + p, axis=-1))
    return rwta, mb


def _make_inputs(key, B, NM):
    k1, k2, k3, k4 = jax.random.split(key, 4)
    pred_q = jax.random.normal(k1, (B, NM, 4), dtype=jnp.float32)
    pred_q = pred_q / jnp.linalg.norm(pred_q, axis=-1, keepdims=True)
    gt_q = jax.random.normal(k2, (B, 4), dtype=jnp.float32)
    gt_q = gt_q / jnp.linalg.norm(gt_q, axis=-1, keepdims=True)
    Zbatch = -(jax.random.uniform(k3, (B, NM, 3), dtype=jnp.float32) * 100.0 + 1.0)
    weights = jax.random.normal(k4, (B, NM), dtype=jnp.float32)
    return pred_q, Zbatch, weights, gt_q


if __name__ == "__main__":
    key = jax.random.PRNGKey(0)

    # Small single-tile test, both selection modes.
    B, NM = 8, 4
    pred_q, Zbatch, weights, gt_q = _make_inputs(key, B, NM)
    for use_l1 in (False, True):
        run = jax.jit(functools.partial(rwta_mb_loss, nm=NM, epsilon=0.95,
                                        use_l1=use_l1))
        rwta, mb = run(pred_q, Zbatch, weights, gt_q)
        jax.block_until_ready((rwta, mb))
        ref_rwta, ref_mb = _reference_jnp(pred_q, Zbatch, weights, gt_q,
                                          nm=NM, epsilon=0.95, use_l1=use_l1)
        assert jnp.allclose(rwta, ref_rwta, rtol=1e-3, atol=1e-3), (rwta, ref_rwta)
        assert jnp.allclose(mb, ref_mb, rtol=1e-3, atol=1e-3), (mb, ref_mb)
        assert jnp.isfinite(rwta) and jnp.isfinite(mb)

    # Multi-tile test (exercises the B-tiled grid + padding mask + partial sums).
    B2, NM2 = 2500, 4
    pred_q2, Zbatch2, weights2, gt_q2 = _make_inputs(jax.random.PRNGKey(1), B2, NM2)
    run2 = jax.jit(functools.partial(rwta_mb_loss, nm=NM2, epsilon=0.95,
                                     use_l1=False, block_rows=8))
    rwta2, mb2 = run2(pred_q2, Zbatch2, weights2, gt_q2)
    jax.block_until_ready((rwta2, mb2))
    ref_rwta2, ref_mb2 = _reference_jnp(pred_q2, Zbatch2, weights2, gt_q2,
                                        nm=NM2, epsilon=0.95, use_l1=False)
    assert jnp.allclose(rwta2, ref_rwta2, rtol=1e-3, atol=1e-3), (rwta2, ref_rwta2)
    assert jnp.allclose(mb2, ref_mb2, rtol=1e-3, atol=1e-3), (mb2, ref_mb2)
    assert jnp.isfinite(rwta2) and jnp.isfinite(mb2)

    print("KERNEL_OK")
</pallas_src>

<mosaic_0001>
module attributes {stable_mosaic.version = 11 : i64} {
  func.func @_rwta_mb_kernel(%arg0: i32, %arg1: memref<4x4x32x128xf32, #tpu.memory_space<vmem>>, %arg2: memref<4x32x128xf32, #tpu.memory_space<vmem>>, %arg3: memref<3x4x32x128xf32, #tpu.memory_space<vmem>>, %arg4: memref<4x32x128xf32, #tpu.memory_space<vmem>>, %arg5: memref<1x3x8x128xf32, #tpu.memory_space<vmem>>) attributes {dimension_semantics = [#tpu.dimension_semantics<parallel>], iteration_bounds = array<i64: 1>, scalar_prefetch = 0 : i64, scratch_operands = 0 : i64, tpu.core_type = #tpu.core_type<tc>, window_params = [{transform_indices = @transform_0, window_bounds = array<i64: 4, 4, 32, 128>}, {transform_indices = @transform_1, window_bounds = array<i64: 4, 32, 128>}, {transform_indices = @transform_2, window_bounds = array<i64: 3, 4, 32, 128>}, {transform_indices = @transform_3, window_bounds = array<i64: 4, 32, 128>}, {transform_indices = @transform_4, window_bounds = array<i64: 1, 3, 8, 128>}]} {
    %c0 = arith.constant 0 : index
    %c0_0 = arith.constant 0 : index
    %c0_1 = arith.constant 0 : index
    %0 = vector.load %arg2[%c0, %c0_0, %c0_1] : memref<4x32x128xf32, #tpu.memory_space<vmem>>, vector<1x32x128xf32>
    %1 = vector.shape_cast %0 : vector<1x32x128xf32> to vector<32x128xf32>
    %c1 = arith.constant 1 : index
    %c0_2 = arith.constant 0 : index
    %c0_3 = arith.constant 0 : index
    %2 = vector.load %arg2[%c1, %c0_2, %c0_3] : memref<4x32x128xf32, #tpu.memory_space<vmem>>, vector<1x32x128xf32>
    %3 = vector.shape_cast %2 : vector<1x32x128xf32> to vector<32x128xf32>
    %c2 = arith.constant 2 : index
    %c0_4 = arith.constant 0 : index
    %c0_5 = arith.constant 0 : index
    %4 = vector.load %arg2[%c2, %c0_4, %c0_5] : memref<4x32x128xf32, #tpu.memory_space<vmem>>, vector<1x32x128xf32>
    %5 = vector.shape_cast %4 : vector<1x32x128xf32> to vector<32x128xf32>
    %c3 = arith.constant 3 : index
    %c0_6 = arith.constant 0 : index
    %c0_7 = arith.constant 0 : index
    %6 = vector.load %arg2[%c3, %c0_6, %c0_7] : memref<4x32x128xf32, #tpu.memory_space<vmem>>, vector<1x32x128xf32>
    %7 = vector.shape_cast %6 : vector<1x32x128xf32> to vector<32x128xf32>
    %8 = tpu.iota {dimensions = array<i32: 0>} : vector<32x128xi32>
    %9 = tpu.iota {dimensions = array<i32: 1>} : vector<32x128xi32>
    %c32_i32 = arith.constant 32 : i32
    %10 = arith.muli %arg0, %c32_i32 : i32
    %11 = vector.broadcast %10 : i32 to vector<32x128xi32>
    %12 = arith.addi %11, %8 : vector<32x128xi32>
    %c128_i32 = arith.constant 128 : i32
    %13 = vector.broadcast %c128_i32 : i32 to vector<32x128xi32>
    %14 = arith.muli %12, %13 : vector<32x128xi32>
    %15 = arith.addi %14, %9 : vector<32x128xi32>
    %c8_i32 = arith.constant 8 : i32
    %16 = vector.broadcast %c8_i32 : i32 to vector<32x128xi32>
    %17 = arith.cmpi slt, %15, %16 : vector<32x128xi32>
    %c0_8 = arith.constant 0 : index
    %c0_9 = arith.constant 0 : index
    %c0_10 = arith.constant 0 : index
    %c0_11 = arith.constant 0 : index
    %18 = vector.load %arg1[%c0_8, %c0_9, %c0_10, %c0_11] : memref<4x4x32x128xf32, #tpu.memory_space<vmem>>, vector<1x1x32x128xf32>
    %19 = vector.shape_cast %18 : vector<1x1x32x128xf32> to vector<32x128xf32>
    %c1_12 = arith.constant 1 : index
    %c0_13 = arith.constant 0 : index
    %c0_14 = arith.constant 0 : index
    %c0_15 = arith.constant 0 : index
    %20 = vector.load %arg1[%c1_12, %c0_13, %c0_14, %c0_15] : memref<4x4x32x128xf32, #tpu.memory_space<vmem>>, vector<1x1x32x128xf32>
    %21 = vector.shape_cast %20 : vector<1x1x32x128xf32> to vector<32x128xf32>
    %c2_16 = arith.constant 2 : index
    %c0_17 = arith.constant 0 : index
    %c0_18 = arith.constant 0 : index
    %c0_19 = arith.constant 0 : index
    %22 = vector.load %arg1[%c2_16, %c0_17, %c0_18, %c0_19] : memref<4x4x32x128xf32, #tpu.memory_space<vmem>>, vector<1x1x32x128xf32>
    %23 = vector.shape_cast %22 : vector<1x1x32x128xf32> to vector<32x128xf32>
    %c3_20 = arith.constant 3 : index
    %c0_21 = arith.constant 0 : index
    %c0_22 = arith.constant 0 : index
    %c0_23 = arith.constant 0 : index
    %24 = vector.load %arg1[%c3_20, %c0_21, %c0_22, %c0_23] : memref<4x4x32x128xf32, #tpu.memory_space<vmem>>, vector<1x1x32x128xf32>
    %25 = vector.shape_cast %24 : vector<1x1x32x128xf32> to vector<32x128xf32>
    %c0_24 = arith.constant 0 : index
    %c0_25 = arith.constant 0 : index
    %c0_26 = arith.constant 0 : index
    %c0_27 = arith.constant 0 : index
    %26 = vector.load %arg3[%c0_24, %c0_25, %c0_26, %c0_27] : memref<3x4x32x128xf32, #tpu.memory_space<vmem>>, vector<1x1x32x128xf32>
    %27 = vector.shape_cast %26 : vector<1x1x32x128xf32> to vector<32x128xf32>
    %c1_28 = arith.constant 1 : index
    %c0_29 = arith.constant 0 : index
    %c0_30 = arith.constant 0 : index
    %c0_31 = arith.constant 0 : index
    %28 = vector.load %arg3[%c1_28, %c0_29, %c0_30, %c0_31] : memref<3x4x32x128xf32, #tpu.memory_space<vmem>>, vector<1x1x32x128xf32>
    %29 = vector.shape_cast %28 : vector<1x1x32x128xf32> to vector<32x128xf32>
    %c2_32 = arith.constant 2 : index
    %c0_33 = arith.constant 0 : index
    %c0_34 = arith.constant 0 : index
    %c0_35 = arith.constant 0 : index
    %30 = vector.load %arg3[%c2_32, %c0_33, %c0_34, %c0_35] : memref<3x4x32x128xf32, #tpu.memory_space<vmem>>, vector<1x1x32x128xf32>
    %31 = vector.shape_cast %30 : vector<1x1x32x128xf32> to vector<32x128xf32>
    %cst = arith.constant 0.000000e+00 : f32
    %32 = vector.broadcast %cst : f32 to vector<32x128xf32>
    %33 = arith.subf %32, %21 : vector<32x128xf32>
    %34 = arith.mulf %33, %1 : vector<32x128xf32>
    %35 = arith.mulf %19, %3 : vector<32x128xf32>
    %36 = arith.addf %34, %35 : vector<32x128xf32>
    %37 = arith.mulf %25, %5 : vector<32x128xf32>
    %38 = arith.addf %36, %37 : vector<32x128xf32>
    %39 = arith.mulf %23, %7 : vector<32x128xf32>
    %40 = arith.subf %38, %39 : vector<32x128xf32>
    %cst_36 = arith.constant 0.000000e+00 : f32
    %41 = vector.broadcast %cst_36 : f32 to vector<32x128xf32>
    %42 = arith.subf %41, %23 : vector<32x128xf32>
    %43 = arith.mulf %42, %1 : vector<32x128xf32>
    %44 = arith.mulf %25, %3 : vector<32x128xf32>
    %45 = arith.subf %43, %44 : vector<32x128xf32>
    %46 = arith.mulf %19, %5 : vector<32x128xf32>
    %47 = arith.addf %45, %46 : vector<32x128xf32>
    %48 = arith.mulf %21, %7 : vector<32x128xf32>
    %49 = arith.addf %47, %48 : vector<32x128xf32>
    %cst_37 = arith.constant 0.000000e+00 : f32
    %50 = vector.broadcast %cst_37 : f32 to vector<32x128xf32>
    %51 = arith.subf %50, %25 : vector<32x128xf32>
    %52 = arith.mulf %51, %1 : vector<32x128xf32>
    %53 = arith.mulf %23, %3 : vector<32x128xf32>
    %54 = arith.addf %52, %53 : vector<32x128xf32>
    %55 = arith.mulf %21, %5 : vector<32x128xf32>
    %56 = arith.subf %54, %55 : vector<32x128xf32>
    %57 = arith.mulf %19, %7 : vector<32x128xf32>
    %58 = arith.addf %56, %57 : vector<32x128xf32>
    %59 = arith.mulf %27, %40 : vector<32x128xf32>
    %60 = arith.mulf %59, %40 : vector<32x128xf32>
    %61 = arith.mulf %29, %49 : vector<32x128xf32>
    %62 = arith.mulf %61, %49 : vector<32x128xf32>
    %63 = arith.addf %60, %62 : vector<32x128xf32>
    %64 = arith.mulf %31, %58 : vector<32x128xf32>
    %65 = arith.mulf %64, %58 : vector<32x128xf32>
    %66 = arith.addf %63, %65 : vector<32x128xf32>
    %cst_38 = arith.constant 0.000000e+00 : f32
    %67 = vector.broadcast %cst_38 : f32 to vector<32x128xf32>
    %68 = arith.subf %67, %27 : vector<32x128xf32>
    %cst_39 = arith.constant 9.99999997E-7 : f32
    %69 = vector.broadcast %cst_39 : f32 to vector<32x128xf32>
    %70 = arith.maximumf %68, %69 : vector<32x128xf32>
    %cst_40 = arith.constant 0.000000e+00 : f32
    %71 = vector.broadcast %cst_40 : f32 to vector<32x128xf32>
    %72 = arith.subf %71, %29 : vector<32x128xf32>
    %cst_41 = arith.constant 9.99999997E-7 : f32
    %73 = vector.broadcast %cst_41 : f32 to vector<32x128xf32>
    %74 = arith.maximumf %72, %73 : vector<32x128xf32>
    %75 = arith.mulf %70, %74 : vector<32x128xf32>
    %cst_42 = arith.constant 0.000000e+00 : f32
    %76 = vector.broadcast %cst_42 : f32 to vector<32x128xf32>
    %77 = arith.subf %76, %31 : vector<32x128xf32>
    %cst_43 = arith.constant 9.99999997E-7 : f32
    %78 = vector.broadcast %cst_43 : f32 to vector<32x128xf32>
    %79 = arith.maximumf %77, %78 : vector<32x128xf32>
    %80 = arith.mulf %75, %79 : vector<32x128xf32>
    %81 = math.log %80 : vector<32x128xf32>
    %cst_44 = arith.constant 5.000000e-01 : f32
    %82 = vector.broadcast %cst_44 : f32 to vector<32x128xf32>
    %83 = arith.mulf %82, %81 : vector<32x128xf32>
    %cst_45 = arith.constant 1.71709478 : f32
    %84 = vector.broadcast %cst_45 : f32 to vector<32x128xf32>
    %85 = arith.subf %84, %83 : vector<32x128xf32>
    %86 = arith.subf %66, %85 : vector<32x128xf32>
    %c0_46 = arith.constant 0 : index
    %c0_47 = arith.constant 0 : index
    %c0_48 = arith.constant 0 : index
    %87 = vector.load %arg4[%c0_46, %c0_47, %c0_48] : memref<4x32x128xf32, #tpu.memory_space<vmem>>, vector<1x32x128xf32>
    %88 = vector.shape_cast %87 : vector<1x32x128xf32> to vector<32x128xf32>
    %c0_49 = arith.constant 0 : index
    %c1_50 = arith.constant 1 : index
    %c0_51 = arith.constant 0 : index
    %c0_52 = arith.constant 0 : index
    %89 = vector.load %arg1[%c0_49, %c1_50, %c0_51, %c0_52] : memref<4x4x32x128xf32, #tpu.memory_space<vmem>>, vector<1x1x32x128xf32>
    %90 = vector.shape_cast %89 : vector<1x1x32x128xf32> to vector<32x128xf32>
    %c1_53 = arith.constant 1 : index
    %c1_54 = arith.constant 1 : index
    %c0_55 = arith.constant 0 : index
    %c0_56 = arith.constant 0 : index
    %91 = vector.load %arg1[%c1_53, %c1_54, %c0_55, %c0_56] : memref<4x4x32x128xf32, #tpu.memory_space<vmem>>, vector<1x1x32x128xf32>
    %92 = vector.shape_cast %91 : vector<1x1x32x128xf32> to vector<32x128xf32>
    %c2_57 = arith.constant 2 : index
    %c1_58 = arith.constant 1 : index
    %c0_59 = arith.constant 0 : index
    %c0_60 = arith.constant 0 : index
    %93 = vector.load %arg1[%c2_57, %c1_58, %c0_59, %c0_60] : memref<4x4x32x128xf32, #tpu.memory_space<vmem>>, vector<1x1x32x128xf32>
    %94 = vector.shape_cast %93 : vector<1x1x32x128xf32> to vector<32x128xf32>
    %c3_61 = arith.constant 3 : index
    %c1_62 = arith.constant 1 : index
    %c0_63 = arith.constant 0 : index
    %c0_64 = arith.constant 0 : index
    %95 = vector.load %arg1[%c3_61, %c1_62, %c0_63, %c0_64] : memref<4x4x32x128xf32, #tpu.memory_space<vmem>>, vector<1x1x32x128xf32>
    %96 = vector.shape_cast %95 : vector<1x1x32x128xf32> to vector<32x128xf32>
    %c0_65 = arith.constant 0 : index
    %c1_66 = arith.constant 1 : index
    %c0_67 = arith.constant 0 : index
    %c0_68 = arith.constant 0 : index
    %97 = vector.load %arg3[%c0_65, %c1_66, %c0_67, %c0_68] : memref<3x4x32x128xf32, #tpu.memory_space<vmem>>, vector<1x1x32x128xf32>
    %98 = vector.shape_cast %97 : vector<1x1x32x128xf32> to vector<32x128xf32>
    %c1_69 = arith.constant 1 : index
    %c1_70 = arith.constant 1 : index
    %c0_71 = arith.constant 0 : index
    %c0_72 = arith.constant 0 : index
    %99 = vector.load %arg3[%c1_69, %c1_70, %c0_71, %c0_72] : memref<3x4x32x128xf32, #tpu.memory_space<vmem>>, vector<1x1x32x128xf32>
    %100 = vector.shape_cast %99 : vector<1x1x32x128xf32> to vector<32x128xf32>
    %c2_73 = arith.constant 2 : index
    %c1_74 = arith.constant 1 : index
    %c0_75 = arith.constant 0 : index
    %c0_76 = arith.constant 0 : index
    %101 = vector.load %arg3[%c2_73, %c1_74, %c0_75, %c0_76] : memref<3x4x32x128xf32, #tpu.memory_space<vmem>>, vector<1x1x32x128xf32>
    %102 = vector.shape_cast %101 : vector<1x1x32x128xf32> to vector<32x128xf32>
    %cst_77 = arith.constant 0.000000e+00 : f32
    %103 = vector.broadcast %cst_77 : f32 to vector<32x128xf32>
    %104 = arith.subf %103, %92 : vector<32x128xf32>
    %105 = arith.mulf %104, %1 : vector<32x128xf32>
    %106 = arith.mulf %90, %3 : vector<32x128xf32>
    %107 = arith.addf %105, %106 : vector<32x128xf32>
    %108 = arith.mulf %96, %5 : vector<32x128xf32>
    %109 = arith.addf %107, %108 : vector<32x128xf32>
    %110 = arith.mulf %94, %7 : vector<32x128xf32>
    %111 = arith.subf %109, %110 : vector<32x128xf32>
    %cst_78 = arith.constant 0.000000e+00 : f32
    %112 = vector.broadcast %cst_78 : f32 to vector<32x128xf32>
    %113 = arith.subf %112, %94 : vector<32x128xf32>
    %114 = arith.mulf %113, %1 : vector<32x128xf32>
    %115 = arith.mulf %96, %3 : vector<32x128xf32>
    %116 = arith.subf %114, %115 : vector<32x128xf32>
    %117 = arith.mulf %90, %5 : vector<32x128xf32>
    %118 = arith.addf %116, %117 : vector<32x128xf32>
    %119 = arith.mulf %92, %7 : vector<32x128xf32>
    %120 = arith.addf %118, %119 : vector<32x128xf32>
    %cst_79 = arith.constant 0.000000e+00 : f32
    %121 = vector.broadcast %cst_79 : f32 to vector<32x128xf32>
    %122 = arith.subf %121, %96 : vector<32x128xf32>
    %123 = arith.mulf %122, %1 : vector<32x128xf32>
    %124 = arith.mulf %94, %3 : vector<32x128xf32>
    %125 = arith.addf %123, %124 : vector<32x128xf32>
    %126 = arith.mulf %92, %5 : vector<32x128xf32>
    %127 = arith.subf %125, %126 : vector<32x128xf32>
    %128 = arith.mulf %90, %7 : vector<32x128xf32>
    %129 = arith.addf %127, %128 : vector<32x128xf32>
    %130 = arith.mulf %98, %111 : vector<32x128xf32>
    %131 = arith.mulf %130, %111 : vector<32x128xf32>
    %132 = arith.mulf %100, %120 : vector<32x128xf32>
    %133 = arith.mulf %132, %120 : vector<32x128xf32>
    %134 = arith.addf %131, %133 : vector<32x128xf32>
    %135 = arith.mulf %102, %129 : vector<32x128xf32>
    %136 = arith.mulf %135, %129 : vector<32x128xf32>
    %137 = arith.addf %134, %136 : vector<32x128xf32>
    %cst_80 = arith.constant 0.000000e+00 : f32
    %138 = vector.broadcast %cst_80 : f32 to vector<32x128xf32>
    %139 = arith.subf %138, %98 : vector<32x128xf32>
    %cst_81 = arith.constant 9.99999997E-7 : f32
    %140 = vector.broadcast %cst_81 : f32 to vector<32x128xf32>
    %141 = arith.maximumf %139, %140 : vector<32x128xf32>
    %cst_82 = arith.constant 0.000000e+00 : f32
    %142 = vector.broadcast %cst_82 : f32 to vector<32x128xf32>
    %143 = arith.subf %142, %100 : vector<32x128xf32>
    %cst_83 = arith.constant 9.99999997E-7 : f32
    %144 = vector.broadcast %cst_83 : f32 to vector<32x128xf32>
    %145 = arith.maximumf %143, %144 : vector<32x128xf32>
    %146 = arith.mulf %141, %145 : vector<32x128xf32>
    %cst_84 = arith.constant 0.000000e+00 : f32
    %147 = vector.broadcast %cst_84 : f32 to vector<32x128xf32>
    %148 = arith.subf %147, %102 : vector<32x128xf32>
    %cst_85 = arith.constant 9.99999997E-7 : f32
    %149 = vector.broadcast %cst_85 : f32 to vector<32x128xf32>
    %150 = arith.maximumf %148, %149 : vector<32x128xf32>
    %151 = arith.mulf %146, %150 : vector<32x128xf32>
    %152 = math.log %151 : vector<32x128xf32>
    %cst_86 = arith.constant 5.000000e-01 : f32
    %153 = vector.broadcast %cst_86 : f32 to vector<32x128xf32>
    %154 = arith.mulf %153, %152 : vector<32x128xf32>
    %cst_87 = arith.constant 1.71709478 : f32
    %155 = vector.broadcast %cst_87 : f32 to vector<32x128xf32>
    %156 = arith.subf %155, %154 : vector<32x128xf32>
    %157 = arith.subf %137, %156 : vector<32x128xf32>
    %c1_88 = arith.constant 1 : index
    %c0_89 = arith.constant 0 : index
    %c0_90 = arith.constant 0 : index
    %158 = vector.load %arg4[%c1_88, %c0_89, %c0_90] : memref<4x32x128xf32, #tpu.memory_space<vmem>>, vector<1x32x128xf32>
    %159 = vector.shape_cast %158 : vector<1x32x128xf32> to vector<32x128xf32>
    %c0_91 = arith.constant 0 : index
    %c2_92 = arith.constant 2 : index
    %c0_93 = arith.constant 0 : index
    %c0_94 = arith.constant 0 : index
    %160 = vector.load %arg1[%c0_91, %c2_92, %c0_93, %c0_94] : memref<4x4x32x128xf32, #tpu.memory_space<vmem>>, vector<1x1x32x128xf32>
    %161 = vector.shape_cast %160 : vector<1x1x32x128xf32> to vector<32x128xf32>
    %c1_95 = arith.constant 1 : index
    %c2_96 = arith.constant 2 : index
    %c0_97 = arith.constant 0 : index
    %c0_98 = arith.constant 0 : index
    %162 = vector.load %arg1[%c1_95, %c2_96, %c0_97, %c0_98] : memref<4x4x32x128xf32, #tpu.memory_space<vmem>>, vector<1x1x32x128xf32>
    %163 = vector.shape_cast %162 : vector<1x1x32x128xf32> to vector<32x128xf32>
    %c2_99 = arith.constant 2 : index
    %c2_100 = arith.constant 2 : index
    %c0_101 = arith.constant 0 : index
    %c0_102 = arith.constant 0 : index
    %164 = vector.load %arg1[%c2_99, %c2_100, %c0_101, %c0_102] : memref<4x4x32x128xf32, #tpu.memory_space<vmem>>, vector<1x1x32x128xf32>
    %165 = vector.shape_cast %164 : vector<1x1x32x128xf32> to vector<32x128xf32>
    %c3_103 = arith.constant 3 : index
    %c2_104 = arith.constant 2 : index
    %c0_105 = arith.constant 0 : index
    %c0_106 = arith.constant 0 : index
    %166 = vector.load %arg1[%c3_103, %c2_104, %c0_105, %c0_106] : memref<4x4x32x128xf32, #tpu.memory_space<vmem>>, vector<1x1x32x128xf32>
    %167 = vector.shape_cast %166 : vector<1x1x32x128xf32> to vector<32x128xf32>
    %c0_107 = arith.constant 0 : index
    %c2_108 = arith.constant 2 : index
    %c0_109 = arith.constant 0 : index
    %c0_110 = arith.constant 0 : index
    %168 = vector.load %arg3[%c0_107, %c2_108, %c0_109, %c0_110] : memref<3x4x32x128xf32, #tpu.memory_space<vmem>>, vector<1x1x32x128xf32>
    %169 = vector.shape_cast %168 : vector<1x1x32x128xf32> to vector<32x128xf32>
    %c1_111 = arith.constant 1 : index
    %c2_112 = arith.constant 2 : index
    %c0_113 = arith.constant 0 : index
    %c0_114 = arith.constant 0 : index
    %170 = vector.load %arg3[%c1_111, %c2_112, %c0_113, %c0_114] : memref<3x4x32x128xf32, #tpu.memory_space<vmem>>, vector<1x1x32x128xf32>
    %171 = vector.shape_cast %170 : vector<1x1x32x128xf32> to vector<32x128xf32>
    %c2_115 = arith.constant 2 : index
    %c2_116 = arith.constant 2 : index
    %c0_117 = arith.constant 0 : index
    %c0_118 = arith.constant 0 : index
    %172 = vector.load %arg3[%c2_115, %c2_116, %c0_117, %c0_118] : memref<3x4x32x128xf32, #tpu.memory_space<vmem>>, vector<1x1x32x128xf32>
    %173 = vector.shape_cast %172 : vector<1x1x32x128xf32> to vector<32x128xf32>
    %cst_119 = arith.constant 0.000000e+00 : f32
    %174 = vector.broadcast %cst_119 : f32 to vector<32x128xf32>
    %175 = arith.subf %174, %163 : vector<32x128xf32>
    %176 = arith.mulf %175, %1 : vector<32x128xf32>
    %177 = arith.mulf %161, %3 : vector<32x128xf32>
    %178 = arith.addf %176, %177 : vector<32x128xf32>
    %179 = arith.mulf %167, %5 : vector<32x128xf32>
    %180 = arith.addf %178, %179 : vector<32x128xf32>
    %181 = arith.mulf %165, %7 : vector<32x128xf32>
    %182 = arith.subf %180, %181 : vector<32x128xf32>
    %cst_120 = arith.constant 0.000000e+00 : f32
    %183 = vector.broadcast %cst_120 : f32 to vector<32x128xf32>
    %184 = arith.subf %183, %165 : vector<32x128xf32>
    %185 = arith.mulf %184, %1 : vector<32x128xf32>
    %186 = arith.mulf %167, %3 : vector<32x128xf32>
    %187 = arith.subf %185, %186 : vector<32x128xf32>
    %188 = arith.mulf %161, %5 : vector<32x128xf32>
    %189 = arith.addf %187, %188 : vector<32x128xf32>
    %190 = arith.mulf %163, %7 : vector<32x128xf32>
    %191 = arith.addf %189, %190 : vector<32x128xf32>
    %cst_121 = arith.constant 0.000000e+00 : f32
    %192 = vector.broadcast %cst_121 : f32 to vector<32x128xf32>
    %193 = arith.subf %192, %167 : vector<32x128xf32>
    %194 = arith.mulf %193, %1 : vector<32x128xf32>
    %195 = arith.mulf %165, %3 : vector<32x128xf32>
    %196 = arith.addf %194, %195 : vector<32x128xf32>
    %197 = arith.mulf %163, %5 : vector<32x128xf32>
    %198 = arith.subf %196, %197 : vector<32x128xf32>
    %199 = arith.mulf %161, %7 : vector<32x128xf32>
    %200 = arith.addf %198, %199 : vector<32x128xf32>
    %201 = arith.mulf %169, %182 : vector<32x128xf32>
    %202 = arith.mulf %201, %182 : vector<32x128xf32>
    %203 = arith.mulf %171, %191 : vector<32x128xf32>
    %204 = arith.mulf %203, %191 : vector<32x128xf32>
    %205 = arith.addf %202, %204 : vector<32x128xf32>
    %206 = arith.mulf %173, %200 : vector<32x128xf32>
    %207 = arith.mulf %206, %200 : vector<32x128xf32>
    %208 = arith.addf %205, %207 : vector<32x128xf32>
    %cst_122 = arith.constant 0.000000e+00 : f32
    %209 = vector.broadcast %cst_122 : f32 to vector<32x128xf32>
    %210 = arith.subf %209, %169 : vector<32x128xf32>
    %cst_123 = arith.constant 9.99999997E-7 : f32
    %211 = vector.broadcast %cst_123 : f32 to vector<32x128xf32>
    %212 = arith.maximumf %210, %211 : vector<32x128xf32>
    %cst_124 = arith.constant 0.000000e+00 : f32
    %213 = vector.broadcast %cst_124 : f32 to vector<32x128xf32>
    %214 = arith.subf %213, %171 : vector<32x128xf32>
    %cst_125 = arith.constant 9.99999997E-7 : f32
    %215 = vector.broadcast %cst_125 : f32 to vector<32x128xf32>
    %216 = arith.maximumf %214, %215 : vector<32x128xf32>
    %217 = arith.mulf %212, %216 : vector<32x128xf32>
    %cst_126 = arith.constant 0.000000e+00 : f32
    %218 = vector.broadcast %cst_126 : f32 to vector<32x128xf32>
    %219 = arith.subf %218, %173 : vector<32x128xf32>
    %cst_127 = arith.constant 9.99999997E-7 : f32
    %220 = vector.broadcast %cst_127 : f32 to vector<32x128xf32>
    %221 = arith.maximumf %219, %220 : vector<32x128xf32>
    %222 = arith.mulf %217, %221 : vector<32x128xf32>
    %223 = math.log %222 : vector<32x128xf32>
    %cst_128 = arith.constant 5.000000e-01 : f32
    %224 = vector.broadcast %cst_128 : f32 to vector<32x128xf32>
    %225 = arith.mulf %224, %223 : vector<32x128xf32>
    %cst_129 = arith.constant 1.71709478 : f32
    %226 = vector.broadcast %cst_129 : f32 to vector<32x128xf32>
    %227 = arith.subf %226, %225 : vector<32x128xf32>
    %228 = arith.subf %208, %227 : vector<32x128xf32>
    %c2_130 = arith.constant 2 : index
    %c0_131 = arith.constant 0 : index
    %c0_132 = arith.constant 0 : index
    %229 = vector.load %arg4[%c2_130, %c0_131, %c0_132] : memref<4x32x128xf32, #tpu.memory_space<vmem>>, vector<1x32x128xf32>
    %230 = vector.shape_cast %229 : vector<1x32x128xf32> to vector<32x128xf32>
    %c0_133 = arith.constant 0 : index
    %c3_134 = arith.constant 3 : index
    %c0_135 = arith.constant 0 : index
    %c0_136 = arith.constant 0 : index
    %231 = vector.load %arg1[%c0_133, %c3_134, %c0_135, %c0_136] : memref<4x4x32x128xf32, #tpu.memory_space<vmem>>, vector<1x1x32x128xf32>
    %232 = vector.shape_cast %231 : vector<1x1x32x128xf32> to vector<32x128xf32>
    %c1_137 = arith.constant 1 : index
    %c3_138 = arith.constant 3 : index
    %c0_139 = arith.constant 0 : index
    %c0_140 = arith.constant 0 : index
    %233 = vector.load %arg1[%c1_137, %c3_138, %c0_139, %c0_140] : memref<4x4x32x128xf32, #tpu.memory_space<vmem>>, vector<1x1x32x128xf32>
    %234 = vector.shape_cast %233 : vector<1x1x32x128xf32> to vector<32x128xf32>
    %c2_141 = arith.constant 2 : index
    %c3_142 = arith.constant 3 : index
    %c0_143 = arith.constant 0 : index
    %c0_144 = arith.constant 0 : index
    %235 = vector.load %arg1[%c2_141, %c3_142, %c0_143, %c0_144] : memref<4x4x32x128xf32, #tpu.memory_space<vmem>>, vector<1x1x32x128xf32>
    %236 = vector.shape_cast %235 : vector<1x1x32x128xf32> to vector<32x128xf32>
    %c3_145 = arith.constant 3 : index
    %c3_146 = arith.constant 3 : index
    %c0_147 = arith.constant 0 : index
    %c0_148 = arith.constant 0 : index
    %237 = vector.load %arg1[%c3_145, %c3_146, %c0_147, %c0_148] : memref<4x4x32x128xf32, #tpu.memory_space<vmem>>, vector<1x1x32x128xf32>
    %238 = vector.shape_cast %237 : vector<1x1x32x128xf32> to vector<32x128xf32>
    %c0_149 = arith.constant 0 : index
    %c3_150 = arith.constant 3 : index
    %c0_151 = arith.constant 0 : index
    %c0_152 = arith.constant 0 : index
    %239 = vector.load %arg3[%c0_149, %c3_150, %c0_151, %c0_152] : memref<3x4x32x128xf32, #tpu.memory_space<vmem>>, vector<1x1x32x128xf32>
    %240 = vector.shape_cast %239 : vector<1x1x32x128xf32> to vector<32x128xf32>
    %c1_153 = arith.constant 1 : index
    %c3_154 = arith.constant 3 : index
    %c0_155 = arith.constant 0 : index
    %c0_156 = arith.constant 0 : index
    %241 = vector.load %arg3[%c1_153, %c3_154, %c0_155, %c0_156] : memref<3x4x32x128xf32, #tpu.memory_space<vmem>>, vector<1x1x32x128xf32>
    %242 = vector.shape_cast %241 : vector<1x1x32x128xf32> to vector<32x128xf32>
    %c2_157 = arith.constant 2 : index
    %c3_158 = arith.constant 3 : index
    %c0_159 = arith.constant 0 : index
    %c0_160 = arith.constant 0 : index
    %243 = vector.load %arg3[%c2_157, %c3_158, %c0_159, %c0_160] : memref<3x4x32x128xf32, #tpu.memory_space<vmem>>, vector<1x1x32x128xf32>
    %244 = vector.shape_cast %243 : vector<1x1x32x128xf32> to vector<32x128xf32>
    %cst_161 = arith.constant 0.000000e+00 : f32
    %245 = vector.broadcast %cst_161 : f32 to vector<32x128xf32>
    %246 = arith.subf %245, %234 : vector<32x128xf32>
    %247 = arith.mulf %246, %1 : vector<32x128xf32>
    %248 = arith.mulf %232, %3 : vector<32x128xf32>
    %249 = arith.addf %247, %248 : vector<32x128xf32>
    %250 = arith.mulf %238, %5 : vector<32x128xf32>
    %251 = arith.addf %249, %250 : vector<32x128xf32>
    %252 = arith.mulf %236, %7 : vector<32x128xf32>
    %253 = arith.subf %251, %252 : vector<32x128xf32>
    %cst_162 = arith.constant 0.000000e+00 : f32
    %254 = vector.broadcast %cst_162 : f32 to vector<32x128xf32>
    %255 = arith.subf %254, %236 : vector<32x128xf32>
    %256 = arith.mulf %255, %1 : vector<32x128xf32>
    %257 = arith.mulf %238, %3 : vector<32x128xf32>
    %258 = arith.subf %256, %257 : vector<32x128xf32>
    %259 = arith.mulf %232, %5 : vector<32x128xf32>
    %260 = arith.addf %258, %259 : vector<32x128xf32>
    %261 = arith.mulf %234, %7 : vector<32x128xf32>
    %262 = arith.addf %260, %261 : vector<32x128xf32>
    %cst_163 = arith.constant 0.000000e+00 : f32
    %263 = vector.broadcast %cst_163 : f32 to vector<32x128xf32>
    %264 = arith.subf %263, %238 : vector<32x128xf32>
    %265 = arith.mulf %264, %1 : vector<32x128xf32>
    %266 = arith.mulf %236, %3 : vector<32x128xf32>
    %267 = arith.addf %265, %266 : vector<32x128xf32>
    %268 = arith.mulf %234, %5 : vector<32x128xf32>
    %269 = arith.subf %267, %268 : vector<32x128xf32>
    %270 = arith.mulf %232, %7 : vector<32x128xf32>
    %271 = arith.addf %269, %270 : vector<32x128xf32>
    %272 = arith.mulf %240, %253 : vector<32x128xf32>
    %273 = arith.mulf %272, %253 : vector<32x128xf32>
    %274 = arith.mulf %242, %262 : vector<32x128xf32>
    %275 = arith.mulf %274, %262 : vector<32x128xf32>
    %276 = arith.addf %273, %275 : vector<32x128xf32>
    %277 = arith.mulf %244, %271 : vector<32x128xf32>
    %278 = arith.mulf %277, %271 : vector<32x128xf32>
    %279 = arith.addf %276, %278 : vector<32x128xf32>
    %cst_164 = arith.constant 0.000000e+00 : f32
    %280 = vector.broadcast %cst_164 : f32 to vector<32x128xf32>
    %281 = arith.subf %280, %240 : vector<32x128xf32>
    %cst_165 = arith.constant 9.99999997E-7 : f32
    %282 = vector.broadcast %cst_165 : f32 to vector<32x128xf32>
    %283 = arith.maximumf %281, %282 : vector<32x128xf32>
    %cst_166 = arith.constant 0.000000e+00 : f32
    %284 = vector.broadcast %cst_166 : f32 to vector<32x128xf32>
    %285 = arith.subf %284, %242 : vector<32x128xf32>
    %cst_167 = arith.constant 9.99999997E-7 : f32
    %286 = vector.broadcast %cst_167 : f32 to vector<32x128xf32>
    %287 = arith.maximumf %285, %286 : vector<32x128xf32>
    %288 = arith.mulf %283, %287 : vector<32x128xf32>
    %cst_168 = arith.constant 0.000000e+00 : f32
    %289 = vector.broadcast %cst_168 : f32 to vector<32x128xf32>
    %290 = arith.subf %289, %244 : vector<32x128xf32>
    %cst_169 = arith.constant 9.99999997E-7 : f32
    %291 = vector.broadcast %cst_169 : f32 to vector<32x128xf32>
    %292 = arith.maximumf %290, %291 : vector<32x128xf32>
    %293 = arith.mulf %288, %292 : vector<32x128xf32>
    %294 = math.log %293 : vector<32x128xf32>
    %cst_170 = arith.constant 5.000000e-01 : f32
    %295 = vector.broadcast %cst_170 : f32 to vector<32x128xf32>
    %296 = arith.mulf %295, %294 : vector<32x128xf32>
    %cst_171 = arith.constant 1.71709478 : f32
    %297 = vector.broadcast %cst_171 : f32 to vector<32x128xf32>
    %298 = arith.subf %297, %296 : vector<32x128xf32>
    %299 = arith.subf %279, %298 : vector<32x128xf32>
    %c3_172 = arith.constant 3 : index
    %c0_173 = arith.constant 0 : index
    %c0_174 = arith.constant 0 : index
    %300 = vector.load %arg4[%c3_172, %c0_173, %c0_174] : memref<4x32x128xf32, #tpu.memory_space<vmem>>, vector<1x32x128xf32>
    %301 = vector.shape_cast %300 : vector<1x32x128xf32> to vector<32x128xf32>
    %302 = arith.addf %86, %157 : vector<32x128xf32>
    %303 = arith.addf %302, %228 : vector<32x128xf32>
    %304 = arith.addf %303, %299 : vector<32x128xf32>
    %305 = arith.maximumf %86, %157 : vector<32x128xf32>
    %306 = arith.maximumf %305, %228 : vector<32x128xf32>
    %307 = arith.maximumf %306, %299 : vector<32x128xf32>
    %308 = arith.addf %88, %86 : vector<32x128xf32>
    %309 = arith.addf %159, %157 : vector<32x128xf32>
    %310 = arith.addf %230, %228 : vector<32x128xf32>
    %311 = arith.addf %301, %299 : vector<32x128xf32>
    %312 = arith.maximumf %308, %309 : vector<32x128xf32>
    %313 = arith.maximumf %88, %159 : vector<32x128xf32>
    %314 = arith.maximumf %312, %310 : vector<32x128xf32>
    %315 = arith.maximumf %313, %230 : vector<32x128xf32>
    %316 = arith.maximumf %314, %311 : vector<32x128xf32>
    %317 = arith.maximumf %315, %301 : vector<32x128xf32>
    %318 = arith.subf %308, %316 : vector<32x128xf32>
    %319 = math.exp %318 : vector<32x128xf32>
    %320 = arith.subf %88, %317 : vector<32x128xf32>
    %321 = math.exp %320 : vector<32x128xf32>
    %322 = arith.subf %309, %316 : vector<32x128xf32>
    %323 = math.exp %322 : vector<32x128xf32>
    %324 = arith.addf %319, %323 : vector<32x128xf32>
    %325 = arith.subf %159, %317 : vector<32x128xf32>
    %326 = math.exp %325 : vector<32x128xf32>
    %327 = arith.addf %321, %326 : vector<32x128xf32>
    %328 = arith.subf %310, %316 : vector<32x128xf32>
    %329 = math.exp %328 : vector<32x128xf32>
    %330 = arith.addf %324, %329 : vector<32x128xf32>
    %331 = arith.subf %230, %317 : vector<32x128xf32>
    %332 = math.exp %331 : vector<32x128xf32>
    %333 = arith.addf %327, %332 : vector<32x128xf32>
    %334 = arith.subf %311, %316 : vector<32x128xf32>
    %335 = math.exp %334 : vector<32x128xf32>
    %336 = arith.addf %330, %335 : vector<32x128xf32>
    %337 = arith.subf %301, %317 : vector<32x128xf32>
    %338 = math.exp %337 : vector<32x128xf32>
    %339 = arith.addf %333, %338 : vector<32x128xf32>
    %340 = math.log %336 : vector<32x128xf32>
    %341 = arith.addf %316, %340 : vector<32x128xf32>
    %342 = math.log %339 : vector<32x128xf32>
    %343 = arith.addf %317, %342 : vector<32x128xf32>
    %344 = arith.subf %341, %343 : vector<32x128xf32>
    %cst_175 = arith.constant 0.000000e+00 : f32
    %345 = vector.broadcast %cst_175 : f32 to vector<32x128xf32>
    %346 = arith.select %17, %304, %345 : vector<32x128xi1>, vector<32x128xf32>
    %347 = vector.shape_cast %346 : vector<32x128xf32> to vector<1x32x128xf32>
    %cst_176 = arith.constant dense<0.000000e+00> : vector<1xf32>
    %348 = vector.multi_reduction <add>, %347, %cst_176 [1, 2] : vector<1x32x128xf32> to vector<1xf32>
    %349 = vector.shape_cast %348 : vector<1xf32> to vector<1x1x1xf32>
    %350 = vector.extract %349[0, 0, 0] : f32 from vector<1x1x1xf32>
    %cst_177 = arith.constant 0.000000e+00 : f32
    %351 = vector.broadcast %cst_177 : f32 to vector<32x128xf32>
    %352 = arith.select %17, %307, %351 : vector<32x128xi1>, vector<32x128xf32>
    %353 = vector.shape_cast %352 : vector<32x128xf32> to vector<1x32x128xf32>
    %cst_178 = arith.constant dense<0.000000e+00> : vector<1xf32>
    %354 = vector.multi_reduction <add>, %353, %cst_178 [1, 2] : vector<1x32x128xf32> to vector<1xf32>
    %355 = vector.shape_cast %354 : vector<1xf32> to vector<1x1x1xf32>
    %356 = vector.extract %355[0, 0, 0] : f32 from vector<1x1x1xf32>
    %cst_179 = arith.constant 0.000000e+00 : f32
    %357 = vector.broadcast %cst_179 : f32 to vector<32x128xf32>
    %358 = arith.select %17, %344, %357 : vector<32x128xi1>, vector<32x128xf32>
    %359 = vector.shape_cast %358 : vector<32x128xf32> to vector<1x32x128xf32>
    %cst_180 = arith.constant dense<0.000000e+00> : vector<1xf32>
    %360 = vector.multi_reduction <add>, %359, %cst_180 [1, 2] : vector<1x32x128xf32> to vector<1xf32>
    %361 = vector.shape_cast %360 : vector<1xf32> to vector<1x1x1xf32>
    %362 = vector.extract %361[0, 0, 0] : f32 from vector<1x1x1xf32>
    %363 = vector.broadcast %350 : f32 to vector<8x128xf32>
    %c0_181 = arith.constant 0 : index
    %c0_182 = arith.constant 0 : index
    %c0_183 = arith.constant 0 : index
    %c0_184 = arith.constant 0 : index
    %364 = vector.load %arg5[%c0_181, %c0_182, %c0_183, %c0_184] : memref<1x3x8x128xf32, #tpu.memory_space<vmem>>, vector<1x1x8x128xf32>
    %365 = vector.shape_cast %364 : vector<1x1x8x128xf32> to vector<8x128xf32>
    %366 = vector.shape_cast %363 : vector<8x128xf32> to vector<1x1x8x128xf32>
    tpu.vector_store %arg5[%c0_181, %c0_182, %c0_183, %c0_184], %366 {strides = array<i32>} : memref<1x3x8x128xf32, #tpu.memory_space<vmem>>, vector<1x1x8x128xf32>,
    %367 = vector.broadcast %356 : f32 to vector<8x128xf32>
    %c0_185 = arith.constant 0 : index
    %c1_186 = arith.constant 1 : index
    %c0_187 = arith.constant 0 : index
    %c0_188 = arith.constant 0 : index
    %368 = vector.load %arg5[%c0_185, %c1_186, %c0_187, %c0_188] : memref<1x3x8x128xf32, #tpu.memory_space<vmem>>, vector<1x1x8x128xf32>
    %369 = vector.shape_cast %368 : vector<1x1x8x128xf32> to vector<8x128xf32>
    %370 = vector.shape_cast %367 : vector<8x128xf32> to vector<1x1x8x128xf32>
    tpu.vector_store %arg5[%c0_185, %c1_186, %c0_187, %c0_188], %370 {strides = array<i32>} : memref<1x3x8x128xf32, #tpu.memory_space<vmem>>, vector<1x1x8x128xf32>,
    %371 = vector.broadcast %362 : f32 to vector<8x128xf32>
    %c0_189 = arith.constant 0 : index
    %c2_190 = arith.constant 2 : index
    %c0_191 = arith.constant 0 : index
    %c0_192 = arith.constant 0 : index
    %372 = vector.load %arg5[%c0_189, %c2_190, %c0_191, %c0_192] : memref<1x3x8x128xf32, #tpu.memory_space<vmem>>, vector<1x1x8x128xf32>
    %373 = vector.shape_cast %372 : vector<1x1x8x128xf32> to vector<8x128xf32>
    %374 = vector.shape_cast %371 : vector<8x128xf32> to vector<1x1x8x128xf32>
    tpu.vector_store %arg5[%c0_189, %c2_190, %c0_191, %c0_192], %374 {strides = array<i32>} : memref<1x3x8x128xf32, #tpu.memory_space<vmem>>, vector<1x1x8x128xf32>,
    return
  }
  func.func @transform_0(%arg0: i32) -> (i32, i32, i32, i32) {
    %c0_i32 = arith.constant 0 : i32
    %c0_i32_0 = arith.constant 0 : i32
    %c0_i32_1 = arith.constant 0 : i32
    %c0_i32_2 = arith.constant 0 : i32
    return %c0_i32, %c0_i32_0, %arg0, %c0_i32_1 : i32, i32, i32, i32
  }
  func.func @transform_1(%arg0: i32) -> (i32, i32, i32) {
    %c0_i32 = arith.constant 0 : i32
    %c0_i32_0 = arith.constant 0 : i32
    %c0_i32_1 = arith.constant 0 : i32
    return %c0_i32, %arg0, %c0_i32_0 : i32, i32, i32
  }
  func.func @transform_2(%arg0: i32) -> (i32, i32, i32, i32) {
    %c0_i32 = arith.constant 0 : i32
    %c0_i32_0 = arith.constant 0 : i32
    %c0_i32_1 = arith.constant 0 : i32
    %c0_i32_2 = arith.constant 0 : i32
    return %c0_i32, %c0_i32_0, %arg0, %c0_i32_1 : i32, i32, i32, i32
  }
  func.func @transform_3(%arg0: i32) -> (i32, i32, i32) {
    %c0_i32 = arith.constant 0 : i32
    %c0_i32_0 = arith.constant 0 : i32
    %c0_i32_1 = arith.constant 0 : i32
    return %c0_i32, %arg0, %c0_i32_0 : i32, i32, i32
  }
  func.func @transform_4(%arg0: i32) -> (i32, i32, i32, i32) {
    %c0_i32 = arith.constant 0 : i32
    %c0_i32_0 = arith.constant 0 : i32
    %c0_i32_1 = arith.constant 0 : i32
    %c0_i32_2 = arith.constant 0 : i32
    return %arg0, %c0_i32, %c0_i32_0, %c0_i32_1 : i32, i32, i32, i32
  }
}

</mosaic_0001>

<llo_original>
// kernel: rwta_mb_loss.1
$region0: #{rwta_mb_loss.1}
  #allocation0 [shape = 'u32[]', space=smem, size = 0x4, offset = 0x4, fixed_abs, tag = 'smem constant byte address 0x4 - core index']
  #allocation1 [shape = 'u32[144,128]{1,0:T(1,128)}', space=vmem, size = 0x12000, scoped, tag = 'internal scratch']
  %s0 = inlined_call_operand.vmem [shape: f32[4,4,32,128], index: 0, kind: input, shape index: {}]
  %s1 = inlined_call_operand.vmem [shape: f32[4,32,128], index: 1, kind: input, shape index: {}]
  %s2 = inlined_call_operand.vmem [shape: f32[3,4,32,128], index: 2, kind: input, shape index: {}]
  %s3 = inlined_call_operand.vmem [shape: f32[4,32,128], index: 3, kind: input, shape index: {}]
  %s4 = inlined_call_operand.vmem [shape: f32[1,3,8,128], index: 4, kind: output, shape index: {}]
  %s5 = sld [smem:[#allocation0]]
  $region26: #{rwta_mb_loss.1} parent=0
    _
  %s7 = ssub.s32 1, %s5
  %s8 = scalar_select 0, %s7, %s5
  // Predicated region
  $region2: #{rwta_mb_loss.1} parent=0 // pred_check
    _
  $region3: #{rwta_mb_loss.1} parent=0 // pred_check_branch
    %10 = sbr.rel (0) target = $region5
  $region4: #{rwta_mb_loss.1} parent=0 // pred_region
    _
  $region5: #{rwta_mb_loss.1} parent=0 // pred_fallthru
    _
  // Predicated region
  $region6: #{rwta_mb_loss.1} parent=0 // pred_check
    _
  $region7: #{rwta_mb_loss.1} parent=0 // pred_check_branch
    %12 = sbr.rel (0) target = $region9
  $region8: #{rwta_mb_loss.1} parent=0 // pred_region
    _
  $region9: #{rwta_mb_loss.1} parent=0 // pred_fallthru
    _
  // Predicated region
  $region10: #{rwta_mb_loss.1} parent=0 // pred_check
    _
  $region11: #{rwta_mb_loss.1} parent=0 // pred_check_branch
    %14 = sbr.rel (0) target = $region13
  $region12: #{rwta_mb_loss.1} parent=0 // pred_region
    _
  $region13: #{rwta_mb_loss.1} parent=0 // pred_fallthru
    _
  // Predicated region
  $region14: #{rwta_mb_loss.1} parent=0 // pred_check
    _
  $region15: #{rwta_mb_loss.1} parent=0 // pred_check_branch
    %16 = sbr.rel (0) target = $region17
  $region16: #{rwta_mb_loss.1} parent=0 // pred_region
    _
  $region17: #{rwta_mb_loss.1} parent=0 // pred_fallthru
    _
  %v17 = vld [vmem:[%s1] sm:$0xff]
  %v18 = vld [vmem:[%s1 + $0x8] sm:$0xff]
  %v19 = vld [vmem:[%s1 + $0x10] sm:$0xff]
  %v20 = vld [vmem:[%s1 + $0x18] sm:$0xff]
  %s21 = scalar_lea.vmem %s1, 32
  %v22 = vld [vmem:[%s21] sm:$0xff]
  %v23 = vld [vmem:[%s21 + $0x8] sm:$0xff]
  %v24 = vld [vmem:[%s21 + $0x10] sm:$0xff]
  %v25 = vld [vmem:[%s21 + $0x18] sm:$0xff]
  %s26 = scalar_lea.vmem %s1, 64
  %v27 = vld [vmem:[%s26] sm:$0xff]
  %v28 = vld [vmem:[%s26 + $0x8] sm:$0xff]
  %v29 = vld [vmem:[%s26 + $0x10] sm:$0xff]
  %v30 = vld [vmem:[%s26 + $0x18] sm:$0xff]
  %s31 = scalar_lea.vmem %s1, 96
  %v32 = vld [vmem:[%s31] sm:$0xff]
  %v33 = vld [vmem:[%s31 + $0x8] sm:$0xff]
  %v34 = vld [vmem:[%s31 + $0x10] sm:$0xff]
  %v35 = vld [vmem:[%s31 + $0x18] sm:$0xff]
  %v36 = vlaneseq
  %v37 = vshrl.u32 %v36, 7
  %v38 = vadd.s32 %v37, 8
  %v39 = vadd.s32 %v37, 16
  %v40 = vadd.s32 %v37, 24
  %v41 = vlaneseq
  %v42 = vand.u32 %v41, 127
  %s43 = smul.u32 0, 32
  %v44 = vstv %s43
  %v45 = vadd.s32 %v44, %v37
  %v46 = vadd.s32 %v44, %v38
  %v47 = vadd.s32 %v44, %v39
  %v48 = vadd.s32 %v44, %v40
  %v49 = vmul.u32 %v45, 128
  %v50 = vmul.u32 %v46, 128
  %v51 = vmul.u32 %v47, 128
  %v52 = vmul.u32 %v48, 128
  %v53 = vadd.s32 %v49, %v42
  %v54 = vadd.s32 %v50, %v42
  %v55 = vadd.s32 %v51, %v42
  %v56 = vadd.s32 %v52, %v42
  %vm57 = vcmp.lt.s32.totalorder %v53, 8
  %vm58 = vcmp.lt.s32.totalorder %v54, 8
  %vm59 = vcmp.lt.s32.totalorder %v55, 8
  %vm60 = vcmp.lt.s32.totalorder %v56, 8
  %v61 = vld [vmem:[%s0] sm:$0xff]
  %v62 = vld [vmem:[%s0 + $0x8] sm:$0xff]
  %v63 = vld [vmem:[%s0 + $0x10] sm:$0xff]
  %v64 = vld [vmem:[%s0 + $0x18] sm:$0xff]
  %s65 = scalar_lea.vmem %s0, 128
  %v66 = vld [vmem:[%s65] sm:$0xff]
  %v67 = vld [vmem:[%s65 + $0x8] sm:$0xff]
  %v68 = vld [vmem:[%s65 + $0x10] sm:$0xff]
  %v69 = vld [vmem:[%s65 + $0x18] sm:$0xff]
  %s70 = scalar_lea.vmem %s0, 256
  %v71 = vld [vmem:[%s70] sm:$0xff]
  %v72 = vld [vmem:[%s70 + $0x8] sm:$0xff]
  %v73 = vld [vmem:[%s70 + $0x10] sm:$0xff]
  %v74 = vld [vmem:[%s70 + $0x18] sm:$0xff]
  %s75 = scalar_lea.vmem %s0, 384
  %v76 = vld [vmem:[%s75] sm:$0xff]
  %v77 = vld [vmem:[%s75 + $0x8] sm:$0xff]
  %v78 = vld [vmem:[%s75 + $0x10] sm:$0xff]
  %v79 = vld [vmem:[%s75 + $0x18] sm:$0xff]
  %v80 = vld [vmem:[%s2] sm:$0xff]
  %v81 = vld [vmem:[%s2 + $0x8] sm:$0xff]
  %v82 = vld [vmem:[%s2 + $0x10] sm:$0xff]
  %v83 = vld [vmem:[%s2 + $0x18] sm:$0xff]
  %s84 = scalar_lea.vmem %s2, 128
  %v85 = vld [vmem:[%s84] sm:$0xff]
  %v86 = vld [vmem:[%s84 + $0x8] sm:$0xff]
  %v87 = vld [vmem:[%s84 + $0x10] sm:$0xff]
  %v88 = vld [vmem:[%s84 + $0x18] sm:$0xff]
  %s89 = scalar_lea.vmem %s2, 256
  %v90 = vld [vmem:[%s89] sm:$0xff]
  %v91 = vld [vmem:[%s89 + $0x8] sm:$0xff]
  %v92 = vld [vmem:[%s89 + $0x10] sm:$0xff]
  %v93 = vld [vmem:[%s89 + $0x18] sm:$0xff]
  %v94 = vsub.f32 0.0, %v66
  %v95 = vsub.f32 0.0, %v67
  %v96 = vsub.f32 0.0, %v68
  %v97 = vsub.f32 0.0, %v69
  %v98 = vmul.f32 %v94, %v17
  %v99 = vmul.f32 %v95, %v18
  %v100 = vmul.f32 %v96, %v19
  %v101 = vmul.f32 %v97, %v20
  %v102 = vmul.f32 %v61, %v22
  %v103 = vmul.f32 %v62, %v23
  %v104 = vmul.f32 %v63, %v24
  %v105 = vmul.f32 %v64, %v25
  %v106 = vadd.f32 %v98, %v102
  %v107 = vadd.f32 %v99, %v103
  %v108 = vadd.f32 %v100, %v104
  %v109 = vadd.f32 %v101, %v105
  %v110 = vmul.f32 %v76, %v27
  %v111 = vmul.f32 %v77, %v28
  %v112 = vmul.f32 %v78, %v29
  %v113 = vmul.f32 %v79, %v30
  %v114 = vadd.f32 %v106, %v110
  %v115 = vadd.f32 %v107, %v111
  %v116 = vadd.f32 %v108, %v112
  %v117 = vadd.f32 %v109, %v113
  %v118 = vmul.f32 %v71, %v32
  %v119 = vmul.f32 %v72, %v33
  %v120 = vmul.f32 %v73, %v34
  %v121 = vmul.f32 %v74, %v35
  %v122 = vsub.f32 %v114, %v118
  %v123 = vsub.f32 %v115, %v119
  %v124 = vsub.f32 %v116, %v120
  %v125 = vsub.f32 %v117, %v121
  %v126 = vsub.f32 0.0, %v71
  %v127 = vsub.f32 0.0, %v72
  %v128 = vsub.f32 0.0, %v73
  %v129 = vsub.f32 0.0, %v74
  %v130 = vmul.f32 %v126, %v17
  %v131 = vmul.f32 %v127, %v18
  %v132 = vmul.f32 %v128, %v19
  %v133 = vmul.f32 %v129, %v20
  %v134 = vmul.f32 %v76, %v22
  %v135 = vmul.f32 %v77, %v23
  %v136 = vmul.f32 %v78, %v24
  %v137 = vmul.f32 %v79, %v25
  %v138 = vsub.f32 %v130, %v134
  %v139 = vsub.f32 %v131, %v135
  %v140 = vsub.f32 %v132, %v136
  %v141 = vsub.f32 %v133, %v137
  %v142 = vmul.f32 %v61, %v27
  %v143 = vmul.f32 %v62, %v28
  %v144 = vmul.f32 %v63, %v29
  %v145 = vmul.f32 %v64, %v30
  %v146 = vadd.f32 %v138, %v142
  %v147 = vadd.f32 %v139, %v143
  %v148 = vadd.f32 %v140, %v144
  %v149 = vadd.f32 %v141, %v145
  %v150 = vmul.f32 %v66, %v32
  %v151 = vmul.f32 %v67, %v33
  %v152 = vmul.f32 %v68, %v34
  %v153 = vmul.f32 %v69, %v35
  %v154 = vadd.f32 %v146, %v150
  %v155 = vadd.f32 %v147, %v151
  %v156 = vadd.f32 %v148, %v152
  %v157 = vadd.f32 %v149, %v153
  %v158 = vsub.f32 0.0, %v76
  %v159 = vsub.f32 0.0, %v77
  %v160 = vsub.f32 0.0, %v78
  %v161 = vsub.f32 0.0, %v79
  %v162 = vmul.f32 %v158, %v17
  %v163 = vmul.f32 %v159, %v18
  %v164 = vmul.f32 %v160, %v19
  %v165 = vmul.f32 %v161, %v20
  %v166 = vmul.f32 %v71, %v22
  %v167 = vmul.f32 %v72, %v23
  %v168 = vmul.f32 %v73, %v24
  %v169 = vmul.f32 %v74, %v25
  %v170 = vadd.f32 %v162, %v166
  %v171 = vadd.f32 %v163, %v167
  %v172 = vadd.f32 %v164, %v168
  %v173 = vadd.f32 %v165, %v169
  %v174 = vmul.f32 %v66, %v27
  %v175 = vmul.f32 %v67, %v28
  %v176 = vmul.f32 %v68, %v29
  %v177 = vmul.f32 %v69, %v30
  %v178 = vsub.f32 %v170, %v174
  %v179 = vsub.f32 %v171, %v175
  %v180 = vsub.f32 %v172, %v176
  %v181 = vsub.f32 %v173, %v177
  %v182 = vmul.f32 %v61, %v32
  %v183 = vmul.f32 %v62, %v33
  %v184 = vmul.f32 %v63, %v34
  %v185 = vmul.f32 %v64, %v35
  %v186 = vadd.f32 %v178, %v182
  %v187 = vadd.f32 %v179, %v183
  %v188 = vadd.f32 %v180, %v184
  %v189 = vadd.f32 %v181, %v185
  %v190 = vmul.f32 %v80, %v122
  %v191 = vmul.f32 %v81, %v123
  %v192 = vmul.f32 %v82, %v124
  %v193 = vmul.f32 %v83, %v125
  %v194 = vmul.f32 %v190, %v122
  %v195 = vmul.f32 %v191, %v123
  %v196 = vmul.f32 %v192, %v124
  %v197 = vmul.f32 %v193, %v125
  %v198 = vmul.f32 %v85, %v154
  %v199 = vmul.f32 %v86, %v155
  %v200 = vmul.f32 %v87, %v156
  %v201 = vmul.f32 %v88, %v157
  %v202 = vmul.f32 %v198, %v154
  %v203 = vmul.f32 %v199, %v155
  %v204 = vmul.f32 %v200, %v156
  %v205 = vmul.f32 %v201, %v157
  %v206 = vadd.f32 %v194, %v202
  %v207 = vadd.f32 %v195, %v203
  %v208 = vadd.f32 %v196, %v204
  %v209 = vadd.f32 %v197, %v205
  %v210 = vmul.f32 %v90, %v186
  %v211 = vmul.f32 %v91, %v187
  %v212 = vmul.f32 %v92, %v188
  %v213 = vmul.f32 %v93, %v189
  %v214 = vmul.f32 %v210, %v186
  %v215 = vmul.f32 %v211, %v187
  %v216 = vmul.f32 %v212, %v188
  %v217 = vmul.f32 %v213, %v189
  %v218 = vadd.f32 %v206, %v214
  %v219 = vadd.f32 %v207, %v215
  %v220 = vadd.f32 %v208, %v216
  %v221 = vadd.f32 %v209, %v217
  %v222 = vsub.f32 0.0, %v80
  %v223 = vsub.f32 0.0, %v81
  %v224 = vsub.f32 0.0, %v82
  %v225 = vsub.f32 0.0, %v83
  %v226 = vmax.f32 %v222, 1e-06
  %v227 = vmax.f32 %v223, 1e-06
  %v228 = vmax.f32 %v224, 1e-06
  %v229 = vmax.f32 %v225, 1e-06
  %v230 = vsub.f32 0.0, %v85
  %v231 = vsub.f32 0.0, %v86
  %v232 = vsub.f32 0.0, %v87
  %v233 = vsub.f32 0.0, %v88
  %v234 = vmax.f32 %v230, 1e-06
  %v235 = vmax.f32 %v231, 1e-06
  %v236 = vmax.f32 %v232, 1e-06
  %v237 = vmax.f32 %v233, 1e-06
  %v238 = vmul.f32 %v226, %v234
  %v239 = vmul.f32 %v227, %v235
  %v240 = vmul.f32 %v228, %v236
  %v241 = vmul.f32 %v229, %v237
  %v242 = vsub.f32 0.0, %v90
  %v243 = vsub.f32 0.0, %v91
  %v244 = vsub.f32 0.0, %v92
  %v245 = vsub.f32 0.0, %v93
  %v246 = vmax.f32 %v242, 1e-06
  %v247 = vmax.f32 %v243, 1e-06
  %v248 = vmax.f32 %v244, 1e-06
  %v249 = vmax.f32 %v245, 1e-06
  %v250 = vmul.f32 %v238, %v246
  %v251 = vmul.f32 %v239, %v247
  %v252 = vmul.f32 %v240, %v248
  %v253 = vmul.f32 %v241, %v249
  %v254 = vlog2.pop %v250
  %v255 = vmul.f32 %v254, 0.6931472
  %v256 = vlog2.pop %v251
  %v257 = vmul.f32 %v256, 0.6931472
  %v258 = vlog2.pop %v252
  %v259 = vmul.f32 %v258, 0.6931472
  %v260 = vlog2.pop %v253
  %v261 = vmul.f32 %v260, 0.6931472
  %v262 = vmul.f32 %v255, 0.5
  %v263 = vmul.f32 %v257, 0.5
  %v264 = vmul.f32 %v259, 0.5
  %v265 = vmul.f32 %v261, 0.5
  %v266 = vsub.f32 1.7170948, %v262
  %v267 = vsub.f32 1.7170948, %v263
  %v268 = vsub.f32 1.7170948, %v264
  %v269 = vsub.f32 1.7170948, %v265
  %v270 = vsub.f32 %v218, %v266
  %v271 = vsub.f32 %v219, %v267
  %v272 = vsub.f32 %v220, %v268
  %v273 = vsub.f32 %v221, %v269
  %v274 = vld [vmem:[%s3] sm:$0xff]
  %v275 = vld [vmem:[%s3 + $0x8] sm:$0xff]
  %v276 = vld [vmem:[%s3 + $0x10] sm:$0xff]
  %v277 = vld [vmem:[%s3 + $0x18] sm:$0xff]
  %s278 = scalar_lea.vmem %s0, 32
  %v279 = vld [vmem:[%s278] sm:$0xff]
  %v280 = vld [vmem:[%s278 + $0x8] sm:$0xff]
  %v281 = vld [vmem:[%s278 + $0x10] sm:$0xff]
  %v282 = vld [vmem:[%s278 + $0x18] sm:$0xff]
  %s283 = scalar_lea.vmem %s0, 160
  %v284 = vld [vmem:[%s283] sm:$0xff]
  %v285 = vld [vmem:[%s283 + $0x8] sm:$0xff]
  %v286 = vld [vmem:[%s283 + $0x10] sm:$0xff]
  %v287 = vld [vmem:[%s283 + $0x18] sm:$0xff]
  %s288 = scalar_lea.vmem %s0, 288
  %v289 = vld [vmem:[%s288] sm:$0xff]
  %v290 = vld [vmem:[%s288 + $0x8] sm:$0xff]
  %v291 = vld [vmem:[%s288 + $0x10] sm:$0xff]
  %v292 = vld [vmem:[%s288 + $0x18] sm:$0xff]
  %s293 = scalar_lea.vmem %s0, 416
  %v294 = vld [vmem:[%s293] sm:$0xff]
  %v295 = vld [vmem:[%s293 + $0x8] sm:$0xff]
  %v296 = vld [vmem:[%s293 + $0x10] sm:$0xff]
  %v297 = vld [vmem:[%s293 + $0x18] sm:$0xff]
  %s298 = scalar_lea.vmem %s2, 32
  %v299 = vld [vmem:[%s298] sm:$0xff]
  %v300 = vld [vmem:[%s298 + $0x8] sm:$0xff]
  %v301 = vld [vmem:[%s298 + $0x10] sm:$0xff]
  %v302 = vld [vmem:[%s298 + $0x18] sm:$0xff]
  %s303 = scalar_lea.vmem %s2, 160
  %v304 = vld [vmem:[%s303] sm:$0xff]
  %v305 = vld [vmem:[%s303 + $0x8] sm:$0xff]
  %v306 = vld [vmem:[%s303 + $0x10] sm:$0xff]
  %v307 = vld [vmem:[%s303 + $0x18] sm:$0xff]
  %s308 = scalar_lea.vmem %s2, 288
  %v309 = vld [vmem:[%s308] sm:$0xff]
  %v310 = vld [vmem:[%s308 + $0x8] sm:$0xff]
  %v311 = vld [vmem:[%s308 + $0x10] sm:$0xff]
  %v312 = vld [vmem:[%s308 + $0x18] sm:$0xff]
  %v313 = vsub.f32 0.0, %v284
  %v314 = vsub.f32 0.0, %v285
  %v315 = vsub.f32 0.0, %v286
  %v316 = vsub.f32 0.0, %v287
  %v317 = vmul.f32 %v313, %v17
  %v318 = vmul.f32 %v314, %v18
  %v319 = vmul.f32 %v315, %v19
  %v320 = vmul.f32 %v316, %v20
  %v321 = vmul.f32 %v279, %v22
  %v322 = vmul.f32 %v280, %v23
  %v323 = vmul.f32 %v281, %v24
  %v324 = vmul.f32 %v282, %v25
  %v325 = vadd.f32 %v317, %v321
  %v326 = vadd.f32 %v318, %v322
  %v327 = vadd.f32 %v319, %v323
  %v328 = vadd.f32 %v320, %v324
  %v329 = vmul.f32 %v294, %v27
  %v330 = vmul.f32 %v295, %v28
  %v331 = vmul.f32 %v296, %v29
  %v332 = vmul.f32 %v297, %v30
  %v333 = vadd.f32 %v325, %v329
  %v334 = vadd.f32 %v326, %v330
  %v335 = vadd.f32 %v327, %v331
  %v336 = vadd.f32 %v328, %v332
  %v337 = vmul.f32 %v289, %v32
  %v338 = vmul.f32 %v290, %v33
  %v339 = vmul.f32 %v291, %v34
  %v340 = vmul.f32 %v292, %v35
  %v341 = vsub.f32 %v333, %v337
  %v342 = vsub.f32 %v334, %v338
  %v343 = vsub.f32 %v335, %v339
  %v344 = vsub.f32 %v336, %v340
  %v345 = vsub.f32 0.0, %v289
  %v346 = vsub.f32 0.0, %v290
  %v347 = vsub.f32 0.0, %v291
  %v348 = vsub.f32 0.0, %v292
  %v349 = vmul.f32 %v345, %v17
  %v350 = vmul.f32 %v346, %v18
  %v351 = vmul.f32 %v347, %v19
  %v352 = vmul.f32 %v348, %v20
  %v353 = vmul.f32 %v294, %v22
  %v354 = vmul.f32 %v295, %v23
  %v355 = vmul.f32 %v296, %v24
  %v356 = vmul.f32 %v297, %v25
  %v357 = vsub.f32 %v349, %v353
  %v358 = vsub.f32 %v350, %v354
  %v359 = vsub.f32 %v351, %v355
  %v360 = vsub.f32 %v352, %v356
  %v361 = vmul.f32 %v279, %v27
  %v362 = vmul.f32 %v280, %v28
  %v363 = vmul.f32 %v281, %v29
  %v364 = vmul.f32 %v282, %v30
  %v365 = vadd.f32 %v357, %v361
  %v366 = vadd.f32 %v358, %v362
  %v367 = vadd.f32 %v359, %v363
  %v368 = vadd.f32 %v360, %v364
  %v369 = vmul.f32 %v284, %v32
  %v370 = vmul.f32 %v285, %v33
  %v371 = vmul.f32 %v286, %v34
  %v372 = vmul.f32 %v287, %v35
  %v373 = vadd.f32 %v365, %v369
  %v374 = vadd.f32 %v366, %v370
  %v375 = vadd.f32 %v367, %v371
  %v376 = vadd.f32 %v368, %v372
  %v377 = vsub.f32 0.0, %v294
  %v378 = vsub.f32 0.0, %v295
  %v379 = vsub.f32 0.0, %v296
  %v380 = vsub.f32 0.0, %v297
  %v381 = vmul.f32 %v377, %v17
  %v382 = vmul.f32 %v378, %v18
  %v383 = vmul.f32 %v379, %v19
  %v384 = vmul.f32 %v380, %v20
  %v385 = vmul.f32 %v289, %v22
  %v386 = vmul.f32 %v290, %v23
  %v387 = vmul.f32 %v291, %v24
  %v388 = vmul.f32 %v292, %v25
  %v389 = vadd.f32 %v381, %v385
  %v390 = vadd.f32 %v382, %v386
  %v391 = vadd.f32 %v383, %v387
  %v392 = vadd.f32 %v384, %v388
  %v393 = vmul.f32 %v284, %v27
  %v394 = vmul.f32 %v285, %v28
  %v395 = vmul.f32 %v286, %v29
  %v396 = vmul.f32 %v287, %v30
  %v397 = vsub.f32 %v389, %v393
  %v398 = vsub.f32 %v390, %v394
  %v399 = vsub.f32 %v391, %v395
  %v400 = vsub.f32 %v392, %v396
  %v401 = vmul.f32 %v279, %v32
  %v402 = vmul.f32 %v280, %v33
  %v403 = vmul.f32 %v281, %v34
  %v404 = vmul.f32 %v282, %v35
  %v405 = vadd.f32 %v397, %v401
  %v406 = vadd.f32 %v398, %v402
  %v407 = vadd.f32 %v399, %v403
  %v408 = vadd.f32 %v400, %v404
  %v409 = vmul.f32 %v299, %v341
  %v410 = vmul.f32 %v300, %v342
  %v411 = vmul.f32 %v301, %v343
  %v412 = vmul.f32 %v302, %v344
  %v413 = vmul.f32 %v409, %v341
  %v414 = vmul.f32 %v410, %v342
  %v415 = vmul.f32 %v411, %v343
  %v416 = vmul.f32 %v412, %v344
  %v417 = vmul.f32 %v304, %v373
  %v418 = vmul.f32 %v305, %v374
  %v419 = vmul.f32 %v306, %v375
  %v420 = vmul.f32 %v307, %v376
  %v421 = vmul.f32 %v417, %v373
  %v422 = vmul.f32 %v418, %v374
  %v423 = vmul.f32 %v419, %v375
  %v424 = vmul.f32 %v420, %v376
  %v425 = vadd.f32 %v413, %v421
  %v426 = vadd.f32 %v414, %v422
  %v427 = vadd.f32 %v415, %v423
  %v428 = vadd.f32 %v416, %v424
  %v429 = vmul.f32 %v309, %v405
  %v430 = vmul.f32 %v310, %v406
  %v431 = vmul.f32 %v311, %v407
  %v432 = vmul.f32 %v312, %v408
  %v433 = vmul.f32 %v429, %v405
  %v434 = vmul.f32 %v430, %v406
  %v435 = vmul.f32 %v431, %v407
  %v436 = vmul.f32 %v432, %v408
  %v437 = vadd.f32 %v425, %v433
  %v438 = vadd.f32 %v426, %v434
  %v439 = vadd.f32 %v427, %v435
  %v440 = vadd.f32 %v428, %v436
  %v441 = vsub.f32 0.0, %v299
  %v442 = vsub.f32 0.0, %v300
  %v443 = vsub.f32 0.0, %v301
  %v444 = vsub.f32 0.0, %v302
  %v445 = vmax.f32 %v441, 1e-06
  %v446 = vmax.f32 %v442, 1e-06
  %v447 = vmax.f32 %v443, 1e-06
  %v448 = vmax.f32 %v444, 1e-06
  %v449 = vsub.f32 0.0, %v304
  %v450 = vsub.f32 0.0, %v305
  %v451 = vsub.f32 0.0, %v306
  %v452 = vsub.f32 0.0, %v307
  %v453 = vmax.f32 %v449, 1e-06
  %v454 = vmax.f32 %v450, 1e-06
  %v455 = vmax.f32 %v451, 1e-06
  %v456 = vmax.f32 %v452, 1e-06
  %v457 = vmul.f32 %v445, %v453
  %v458 = vmul.f32 %v446, %v454
  %v459 = vmul.f32 %v447, %v455
  %v460 = vmul.f32 %v448, %v456
  %v461 = vsub.f32 0.0, %v309
  %v462 = vsub.f32 0.0, %v310
  %v463 = vsub.f32 0.0, %v311
  %v464 = vsub.f32 0.0, %v312
  %v465 = vmax.f32 %v461, 1e-06
  %v466 = vmax.f32 %v462, 1e-06
  %v467 = vmax.f32 %v463, 1e-06
  %v468 = vmax.f32 %v464, 1e-06
  %v469 = vmul.f32 %v457, %v465
  %v470 = vmul.f32 %v458, %v466
  %v471 = vmul.f32 %v459, %v467
  %v472 = vmul.f32 %v460, %v468
  %v473 = vlog2.pop %v469
  %v474 = vmul.f32 %v473, 0.6931472
  %v475 = vlog2.pop %v470
  %v476 = vmul.f32 %v475, 0.6931472
  %v477 = vlog2.pop %v471
  %v478 = vmul.f32 %v477, 0.6931472
  %v479 = vlog2.pop %v472
  %v480 = vmul.f32 %v479, 0.6931472
  %v481 = vmul.f32 %v474, 0.5
  %v482 = vmul.f32 %v476, 0.5
  %v483 = vmul.f32 %v478, 0.5
  %v484 = vmul.f32 %v480, 0.5
  %v485 = vsub.f32 1.7170948, %v481
  %v486 = vsub.f32 1.7170948, %v482
  %v487 = vsub.f32 1.7170948, %v483
  %v488 = vsub.f32 1.7170948, %v484
  %v489 = vsub.f32 %v437, %v485
  %v490 = vsub.f32 %v438, %v486
  %v491 = vsub.f32 %v439, %v487
  %v492 = vsub.f32 %v440, %v488
  %s493 = scalar_lea.vmem %s3, 32
  %v494 = vld [vmem:[%s493] sm:$0xff]
  %v495 = vld [vmem:[%s493 + $0x8] sm:$0xff]
  %v496 = vld [vmem:[%s493 + $0x10] sm:$0xff]
  %v497 = vld [vmem:[%s493 + $0x18] sm:$0xff]
  %s498 = scalar_lea.vmem %s0, 64
  %v499 = vld [vmem:[%s498] sm:$0xff]
  %v500 = vld [vmem:[%s498 + $0x8] sm:$0xff]
  %v501 = vld [vmem:[%s498 + $0x10] sm:$0xff]
  %v502 = vld [vmem:[%s498 + $0x18] sm:$0xff]
  %s503 = scalar_lea.vmem %s0, 192
  %v504 = vld [vmem:[%s503] sm:$0xff]
  %v505 = vld [vmem:[%s503 + $0x8] sm:$0xff]
  %v506 = vld [vmem:[%s503 + $0x10] sm:$0xff]
  %v507 = vld [vmem:[%s503 + $0x18] sm:$0xff]
  %s508 = scalar_lea.vmem %s0, 320
  %v509 = vld [vmem:[%s508] sm:$0xff]
  %v510 = vld [vmem:[%s508 + $0x8] sm:$0xff]
  %v511 = vld [vmem:[%s508 + $0x10] sm:$0xff]
  %v512 = vld [vmem:[%s508 + $0x18] sm:$0xff]
  %s513 = scalar_lea.vmem %s0, 448
  %v514 = vld [vmem:[%s513] sm:$0xff]
  %v515 = vld [vmem:[%s513 + $0x8] sm:$0xff]
  %v516 = vld [vmem:[%s513 + $0x10] sm:$0xff]
  %v517 = vld [vmem:[%s513 + $0x18] sm:$0xff]
  %s518 = scalar_lea.vmem %s2, 64
  %v519 = vld [vmem:[%s518] sm:$0xff]
  %v520 = vld [vmem:[%s518 + $0x8] sm:$0xff]
  %v521 = vld [vmem:[%s518 + $0x10] sm:$0xff]
  %v522 = vld [vmem:[%s518 + $0x18] sm:$0xff]
  %s523 = scalar_lea.vmem %s2, 192
  %v524 = vld [vmem:[%s523] sm:$0xff]
  %v525 = vld [vmem:[%s523 + $0x8] sm:$0xff]
  %v526 = vld [vmem:[%s523 + $0x10] sm:$0xff]
  %v527 = vld [vmem:[%s523 + $0x18] sm:$0xff]
  %s528 = scalar_lea.vmem %s2, 320
  %v529 = vld [vmem:[%s528] sm:$0xff]
  %v530 = vld [vmem:[%s528 + $0x8] sm:$0xff]
  %v531 = vld [vmem:[%s528 + $0x10] sm:$0xff]
  %v532 = vld [vmem:[%s528 + $0x18] sm:$0xff]
  %v533 = vsub.f32 0.0, %v504
  %v534 = vsub.f32 0.0, %v505
  %v535 = vsub.f32 0.0, %v506
  %v536 = vsub.f32 0.0, %v507
  %v537 = vmul.f32 %v533, %v17
  %v538 = vmul.f32 %v534, %v18
  %v539 = vmul.f32 %v535, %v19
  %v540 = vmul.f32 %v536, %v20
  %v541 = vmul.f32 %v499, %v22
  %v542 = vmul.f32 %v500, %v23
  %v543 = vmul.f32 %v501, %v24
  %v544 = vmul.f32 %v502, %v25
  %v545 = vadd.f32 %v537, %v541
  %v546 = vadd.f32 %v538, %v542
  %v547 = vadd.f32 %v539, %v543
  %v548 = vadd.f32 %v540, %v544
  %v549 = vmul.f32 %v514, %v27
  %v550 = vmul.f32 %v515, %v28
  %v551 = vmul.f32 %v516, %v29
  %v552 = vmul.f32 %v517, %v30
  %v553 = vadd.f32 %v545, %v549
  %v554 = vadd.f32 %v546, %v550
  %v555 = vadd.f32 %v547, %v551
  %v556 = vadd.f32 %v548, %v552
  %v557 = vmul.f32 %v509, %v32
  %v558 = vmul.f32 %v510, %v33
  %v559 = vmul.f32 %v511, %v34
  %v560 = vmul.f32 %v512, %v35
  %v561 = vsub.f32 %v553, %v557
  %v562 = vsub.f32 %v554, %v558
  %v563 = vsub.f32 %v555, %v559
  %v564 = vsub.f32 %v556, %v560
  %v565 = vsub.f32 0.0, %v509
  %v566 = vsub.f32 0.0, %v510
  %v567 = vsub.f32 0.0, %v511
  %v568 = vsub.f32 0.0, %v512
  %v569 = vmul.f32 %v565, %v17
  %v570 = vmul.f32 %v566, %v18
  %v571 = vmul.f32 %v567, %v19
  %v572 = vmul.f32 %v568, %v20
  %v573 = vmul.f32 %v514, %v22
  %v574 = vmul.f32 %v515, %v23
  %v575 = vmul.f32 %v516, %v24
  %v576 = vmul.f32 %v517, %v25
  %v577 = vsub.f32 %v569, %v573
  %v578 = vsub.f32 %v570, %v574
  %v579 = vsub.f32 %v571, %v575
  %v580 = vsub.f32 %v572, %v576
  %v581 = vmul.f32 %v499, %v27
  %v582 = vmul.f32 %v500, %v28
  %v583 = vmul.f32 %v501, %v29
  %v584 = vmul.f32 %v502, %v30
  %v585 = vadd.f32 %v577, %v581
  %v586 = vadd.f32 %v578, %v582
  %v587 = vadd.f32 %v579, %v583
  %v588 = vadd.f32 %v580, %v584
  %v589 = vmul.f32 %v504, %v32
  %v590 = vmul.f32 %v505, %v33
  %v591 = vmul.f32 %v506, %v34
  %v592 = vmul.f32 %v507, %v35
  %v593 = vadd.f32 %v585, %v589
  %v594 = vadd.f32 %v586, %v590
  %v595 = vadd.f32 %v587, %v591
  %v596 = vadd.f32 %v588, %v592
  %v597 = vsub.f32 0.0, %v514
  %v598 = vsub.f32 0.0, %v515
  %v599 = vsub.f32 0.0, %v516
  %v600 = vsub.f32 0.0, %v517
  %v601 = vmul.f32 %v597, %v17
  %v602 = vmul.f32 %v598, %v18
  %v603 = vmul.f32 %v599, %v19
  %v604 = vmul.f32 %v600, %v20
  %v605 = vmul.f32 %v509, %v22
  %v606 = vmul.f32 %v510, %v23
  %v607 = vmul.f32 %v511, %v24
  %v608 = vmul.f32 %v512, %v25
  %v609 = vadd.f32 %v601, %v605
  %v610 = vadd.f32 %v602, %v606
  %v611 = vadd.f32 %v603, %v607
  %v612 = vadd.f32 %v604, %v608
  %v613 = vmul.f32 %v504, %v27
  %v614 = vmul.f32 %v505, %v28
  %v615 = vmul.f32 %v506, %v29
  %v616 = vmul.f32 %v507, %v30
  %v617 = vsub.f32 %v609, %v613
  %v618 = vsub.f32 %v610, %v614
  %v619 = vsub.f32 %v611, %v615
  %v620 = vsub.f32 %v612, %v616
  %v621 = vmul.f32 %v499, %v32
  %v622 = vmul.f32 %v500, %v33
  %v623 = vmul.f32 %v501, %v34
  %v624 = vmul.f32 %v502, %v35
  %v625 = vadd.f32 %v617, %v621
  %v626 = vadd.f32 %v618, %v622
  %v627 = vadd.f32 %v619, %v623
  %v628 = vadd.f32 %v620, %v624
  %v629 = vmul.f32 %v519, %v561
  %v630 = vmul.f32 %v520, %v562
  %v631 = vmul.f32 %v521, %v563
  %v632 = vmul.f32 %v522, %v564
  %v633 = vmul.f32 %v629, %v561
  %v634 = vmul.f32 %v630, %v562
  %v635 = vmul.f32 %v631, %v563
  %v636 = vmul.f32 %v632, %v564
  %v637 = vmul.f32 %v524, %v593
  %v638 = vmul.f32 %v525, %v594
  %v639 = vmul.f32 %v526, %v595
  %v640 = vmul.f32 %v527, %v596
  %v641 = vmul.f32 %v637, %v593
  %v642 = vmul.f32 %v638, %v594
  %v643 = vmul.f32 %v639, %v595
  %v644 = vmul.f32 %v640, %v596
  %v645 = vadd.f32 %v633, %v641
  %v646 = vadd.f32 %v634, %v642
  %v647 = vadd.f32 %v635, %v643
  %v648 = vadd.f32 %v636, %v644
  %v649 = vmul.f32 %v529, %v625
  %v650 = vmul.f32 %v530, %v626
  %v651 = vmul.f32 %v531, %v627
  %v652 = vmul.f32 %v532, %v628
  %v653 = vmul.f32 %v649, %v625
  %v654 = vmul.f32 %v650, %v626
  %v655 = vmul.f32 %v651, %v627
  %v656 = vmul.f32 %v652, %v628
  %v657 = vadd.f32 %v645, %v653
  %v658 = vadd.f32 %v646, %v654
  %v659 = vadd.f32 %v647, %v655
  %v660 = vadd.f32 %v648, %v656
  %v661 = vsub.f32 0.0, %v519
  %v662 = vsub.f32 0.0, %v520
  %v663 = vsub.f32 0.0, %v521
  %v664 = vsub.f32 0.0, %v522
  %v665 = vmax.f32 %v661, 1e-06
  %v666 = vmax.f32 %v662, 1e-06
  %v667 = vmax.f32 %v663, 1e-06
  %v668 = vmax.f32 %v664, 1e-06
  %v669 = vsub.f32 0.0, %v524
  %v670 = vsub.f32 0.0, %v525
  %v671 = vsub.f32 0.0, %v526
  %v672 = vsub.f32 0.0, %v527
  %v673 = vmax.f32 %v669, 1e-06
  %v674 = vmax.f32 %v670, 1e-06
  %v675 = vmax.f32 %v671, 1e-06
  %v676 = vmax.f32 %v672, 1e-06
  %v677 = vmul.f32 %v665, %v673
  %v678 = vmul.f32 %v666, %v674
  %v679 = vmul.f32 %v667, %v675
  %v680 = vmul.f32 %v668, %v676
  %v681 = vsub.f32 0.0, %v529
  %v682 = vsub.f32 0.0, %v530
  %v683 = vsub.f32 0.0, %v531
  %v684 = vsub.f32 0.0, %v532
  %v685 = vmax.f32 %v681, 1e-06
  %v686 = vmax.f32 %v682, 1e-06
  %v687 = vmax.f32 %v683, 1e-06
  %v688 = vmax.f32 %v684, 1e-06
  %v689 = vmul.f32 %v677, %v685
  %v690 = vmul.f32 %v678, %v686
  %v691 = vmul.f32 %v679, %v687
  %v692 = vmul.f32 %v680, %v688
  %v693 = vlog2.pop %v689
  %v694 = vmul.f32 %v693, 0.6931472
  %v695 = vlog2.pop %v690
  %v696 = vmul.f32 %v695, 0.6931472
  %v697 = vlog2.pop %v691
  %v698 = vmul.f32 %v697, 0.6931472
  %v699 = vlog2.pop %v692
  %v700 = vmul.f32 %v699, 0.6931472
  %v701 = vmul.f32 %v694, 0.5
  %v702 = vmul.f32 %v696, 0.5
  %v703 = vmul.f32 %v698, 0.5
  %v704 = vmul.f32 %v700, 0.5
  %v705 = vsub.f32 1.7170948, %v701
  %v706 = vsub.f32 1.7170948, %v702
  %v707 = vsub.f32 1.7170948, %v703
  %v708 = vsub.f32 1.7170948, %v704
  %v709 = vsub.f32 %v657, %v705
  %v710 = vsub.f32 %v658, %v706
  %v711 = vsub.f32 %v659, %v707
  %v712 = vsub.f32 %v660, %v708
  %s713 = scalar_lea.vmem %s3, 64
  %v714 = vld [vmem:[%s713] sm:$0xff]
  %v715 = vld [vmem:[%s713 + $0x8] sm:$0xff]
  %v716 = vld [vmem:[%s713 + $0x10] sm:$0xff]
  %v717 = vld [vmem:[%s713 + $0x18] sm:$0xff]
  %s718 = scalar_lea.vmem %s0, 96
  %v719 = vld [vmem:[%s718] sm:$0xff]
  %v720 = vld [vmem:[%s718 + $0x8] sm:$0xff]
  %v721 = vld [vmem:[%s718 + $0x10] sm:$0xff]
  %v722 = vld [vmem:[%s718 + $0x18] sm:$0xff]
  %s723 = scalar_lea.vmem %s0, 224
  %v724 = vld [vmem:[%s723] sm:$0xff]
  %v725 = vld [vmem:[%s723 + $0x8] sm:$0xff]
  %v726 = vld [vmem:[%s723 + $0x10] sm:$0xff]
  %v727 = vld [vmem:[%s723 + $0x18] sm:$0xff]
  %s728 = scalar_lea.vmem %s0, 352
  %v729 = vld [vmem:[%s728] sm:$0xff]
  %v730 = vld [vmem:[%s728 + $0x8] sm:$0xff]
  %v731 = vld [vmem:[%s728 + $0x10] sm:$0xff]
  %v732 = vld [vmem:[%s728 + $0x18] sm:$0xff]
  %s733 = scalar_lea.vmem %s0, 480
  %v734 = vld [vmem:[%s733] sm:$0xff]
  %v735 = vld [vmem:[%s733 + $0x8] sm:$0xff]
  %v736 = vld [vmem:[%s733 + $0x10] sm:$0xff]
  %v737 = vld [vmem:[%s733 + $0x18] sm:$0xff]
  %s738 = scalar_lea.vmem %s2, 96
  %v739 = vld [vmem:[%s738] sm:$0xff]
  %v740 = vld [vmem:[%s738 + $0x8] sm:$0xff]
  %v741 = vld [vmem:[%s738 + $0x10] sm:$0xff]
  %v742 = vld [vmem:[%s738 + $0x18] sm:$0xff]
  %s743 = scalar_lea.vmem %s2, 224
  %v744 = vld [vmem:[%s743] sm:$0xff]
  %v745 = vld [vmem:[%s743 + $0x8] sm:$0xff]
  %v746 = vld [vmem:[%s743 + $0x10] sm:$0xff]
  %v747 = vld [vmem:[%s743 + $0x18] sm:$0xff]
  %s748 = scalar_lea.vmem %s2, 352
  %v749 = vld [vmem:[%s748] sm:$0xff]
  %v750 = vld [vmem:[%s748 + $0x8] sm:$0xff]
  %v751 = vld [vmem:[%s748 + $0x10] sm:$0xff]
  %v752 = vld [vmem:[%s748 + $0x18] sm:$0xff]
  %v753 = vsub.f32 0.0, %v724
  %v754 = vsub.f32 0.0, %v725
  %v755 = vsub.f32 0.0, %v726
  %v756 = vsub.f32 0.0, %v727
  %v757 = vmul.f32 %v753, %v17
  %v758 = vmul.f32 %v754, %v18
  %v759 = vmul.f32 %v755, %v19
  %v760 = vmul.f32 %v756, %v20
  %v761 = vmul.f32 %v719, %v22
  %v762 = vmul.f32 %v720, %v23
  %v763 = vmul.f32 %v721, %v24
  %v764 = vmul.f32 %v722, %v25
  %v765 = vadd.f32 %v757, %v761
  %v766 = vadd.f32 %v758, %v762
  %v767 = vadd.f32 %v759, %v763
  %v768 = vadd.f32 %v760, %v764
  %v769 = vmul.f32 %v734, %v27
  %v770 = vmul.f32 %v735, %v28
  %v771 = vmul.f32 %v736, %v29
  %v772 = vmul.f32 %v737, %v30
  %v773 = vadd.f32 %v765, %v769
  %v774 = vadd.f32 %v766, %v770
  %v775 = vadd.f32 %v767, %v771
  %v776 = vadd.f32 %v768, %v772
  %v777 = vmul.f32 %v729, %v32
  %v778 = vmul.f32 %v730, %v33
  %v779 = vmul.f32 %v731, %v34
  %v780 = vmul.f32 %v732, %v35
  %v781 = vsub.f32 %v773, %v777
  %v782 = vsub.f32 %v774, %v778
  %v783 = vsub.f32 %v775, %v779
  %v784 = vsub.f32 %v776, %v780
  %v785 = vsub.f32 0.0, %v729
  %v786 = vsub.f32 0.0, %v730
  %v787 = vsub.f32 0.0, %v731
  %v788 = vsub.f32 0.0, %v732
  %v789 = vmul.f32 %v785, %v17
  %v790 = vmul.f32 %v786, %v18
  %v791 = vmul.f32 %v787, %v19
  %v792 = vmul.f32 %v788, %v20
  %v793 = vmul.f32 %v734, %v22
  %v794 = vmul.f32 %v735, %v23
  %v795 = vmul.f32 %v736, %v24
  %v796 = vmul.f32 %v737, %v25
  %v797 = vsub.f32 %v789, %v793
  %v798 = vsub.f32 %v790, %v794
  %v799 = vsub.f32 %v791, %v795
  %v800 = vsub.f32 %v792, %v796
  %v801 = vmul.f32 %v719, %v27
  %v802 = vmul.f32 %v720, %v28
  %v803 = vmul.f32 %v721, %v29
  %v804 = vmul.f32 %v722, %v30
  %v805 = vadd.f32 %v797, %v801
  %v806 = vadd.f32 %v798, %v802
  %v807 = vadd.f32 %v799, %v803
  %v808 = vadd.f32 %v800, %v804
  %v809 = vmul.f32 %v724, %v32
  %v810 = vmul.f32 %v725, %v33
  %v811 = vmul.f32 %v726, %v34
  %v812 = vmul.f32 %v727, %v35
  %v813 = vadd.f32 %v805, %v809
  %v814 = vadd.f32 %v806, %v810
  %v815 = vadd.f32 %v807, %v811
  %v816 = vadd.f32 %v808, %v812
  %v817 = vsub.f32 0.0, %v734
  %v818 = vsub.f32 0.0, %v735
  %v819 = vsub.f32 0.0, %v736
  %v820 = vsub.f32 0.0, %v737
  %v821 = vmul.f32 %v817, %v17
  %v822 = vmul.f32 %v818, %v18
  %v823 = vmul.f32 %v819, %v19
  %v824 = vmul.f32 %v820, %v20
  %v825 = vmul.f32 %v729, %v22
  %v826 = vmul.f32 %v730, %v23
  %v827 = vmul.f32 %v731, %v24
  %v828 = vmul.f32 %v732, %v25
  %v829 = vadd.f32 %v821, %v825
  %v830 = vadd.f32 %v822, %v826
  %v831 = vadd.f32 %v823, %v827
  %v832 = vadd.f32 %v824, %v828
  %v833 = vmul.f32 %v724, %v27
  %v834 = vmul.f32 %v725, %v28
  %v835 = vmul.f32 %v726, %v29
  %v836 = vmul.f32 %v727, %v30
  %v837 = vsub.f32 %v829, %v833
  %v838 = vsub.f32 %v830, %v834
  %v839 = vsub.f32 %v831, %v835
  %v840 = vsub.f32 %v832, %v836
  %v841 = vmul.f32 %v719, %v32
  %v842 = vmul.f32 %v720, %v33
  %v843 = vmul.f32 %v721, %v34
  %v844 = vmul.f32 %v722, %v35
  %v845 = vadd.f32 %v837, %v841
  %v846 = vadd.f32 %v838, %v842
  %v847 = vadd.f32 %v839, %v843
  %v848 = vadd.f32 %v840, %v844
  %v849 = vmul.f32 %v739, %v781
  %v850 = vmul.f32 %v740, %v782
  %v851 = vmul.f32 %v741, %v783
  %v852 = vmul.f32 %v742, %v784
  %v853 = vmul.f32 %v849, %v781
  %v854 = vmul.f32 %v850, %v782
  %v855 = vmul.f32 %v851, %v783
  %v856 = vmul.f32 %v852, %v784
  %v857 = vmul.f32 %v744, %v813
  %v858 = vmul.f32 %v745, %v814
  %v859 = vmul.f32 %v746, %v815
  %v860 = vmul.f32 %v747, %v816
  %v861 = vmul.f32 %v857, %v813
  %v862 = vmul.f32 %v858, %v814
  %v863 = vmul.f32 %v859, %v815
  %v864 = vmul.f32 %v860, %v816
  %v865 = vadd.f32 %v853, %v861
  %v866 = vadd.f32 %v854, %v862
  %v867 = vadd.f32 %v855, %v863
  %v868 = vadd.f32 %v856, %v864
  %v869 = vmul.f32 %v749, %v845
  %v870 = vmul.f32 %v750, %v846
  %v871 = vmul.f32 %v751, %v847
  %v872 = vmul.f32 %v752, %v848
  %v873 = vmul.f32 %v869, %v845
  %v874 = vmul.f32 %v870, %v846
  %v875 = vmul.f32 %v871, %v847
  %v876 = vmul.f32 %v872, %v848
  %v877 = vadd.f32 %v865, %v873
  %v878 = vadd.f32 %v866, %v874
  %v879 = vadd.f32 %v867, %v875
  %v880 = vadd.f32 %v868, %v876
  %v881 = vsub.f32 0.0, %v739
  %v882 = vsub.f32 0.0, %v740
  %v883 = vsub.f32 0.0, %v741
  %v884 = vsub.f32 0.0, %v742
  %v885 = vmax.f32 %v881, 1e-06
  %v886 = vmax.f32 %v882, 1e-06
  %v887 = vmax.f32 %v883, 1e-06
  %v888 = vmax.f32 %v884, 1e-06
  %v889 = vsub.f32 0.0, %v744
  %v890 = vsub.f32 0.0, %v745
  %v891 = vsub.f32 0.0, %v746
  %v892 = vsub.f32 0.0, %v747
  %v893 = vmax.f32 %v889, 1e-06
  %v894 = vmax.f32 %v890, 1e-06
  %v895 = vmax.f32 %v891, 1e-06
  %v896 = vmax.f32 %v892, 1e-06
  %v897 = vmul.f32 %v885, %v893
  %v898 = vmul.f32 %v886, %v894
  %v899 = vmul.f32 %v887, %v895
  %v900 = vmul.f32 %v888, %v896
  %v901 = vsub.f32 0.0, %v749
  %v902 = vsub.f32 0.0, %v750
  %v903 = vsub.f32 0.0, %v751
  %v904 = vsub.f32 0.0, %v752
  %v905 = vmax.f32 %v901, 1e-06
  %v906 = vmax.f32 %v902, 1e-06
  %v907 = vmax.f32 %v903, 1e-06
  %v908 = vmax.f32 %v904, 1e-06
  %v909 = vmul.f32 %v897, %v905
  %v910 = vmul.f32 %v898, %v906
  %v911 = vmul.f32 %v899, %v907
  %v912 = vmul.f32 %v900, %v908
  %v913 = vlog2.pop %v909
  %v914 = vmul.f32 %v913, 0.6931472
  %v915 = vlog2.pop %v910
  %v916 = vmul.f32 %v915, 0.6931472
  %v917 = vlog2.pop %v911
  %v918 = vmul.f32 %v917, 0.6931472
  %v919 = vlog2.pop %v912
  %v920 = vmul.f32 %v919, 0.6931472
  %v921 = vmul.f32 %v914, 0.5
  %v922 = vmul.f32 %v916, 0.5
  %v923 = vmul.f32 %v918, 0.5
  %v924 = vmul.f32 %v920, 0.5
  %v925 = vsub.f32 1.7170948, %v921
  %v926 = vsub.f32 1.7170948, %v922
  %v927 = vsub.f32 1.7170948, %v923
  %v928 = vsub.f32 1.7170948, %v924
  %v929 = vsub.f32 %v877, %v925
  %v930 = vsub.f32 %v878, %v926
  %v931 = vsub.f32 %v879, %v927
  %v932 = vsub.f32 %v880, %v928
  %s933 = scalar_lea.vmem %s3, 96
  %v934 = vld [vmem:[%s933] sm:$0xff]
  %v935 = vld [vmem:[%s933 + $0x8] sm:$0xff]
  %v936 = vld [vmem:[%s933 + $0x10] sm:$0xff]
  %v937 = vld [vmem:[%s933 + $0x18] sm:$0xff]
  %v938 = vadd.f32 %v270, %v489
  %v939 = vadd.f32 %v271, %v490
  %v940 = vadd.f32 %v272, %v491
  %v941 = vadd.f32 %v273, %v492
  %v942 = vadd.f32 %v938, %v709
  %v943 = vadd.f32 %v939, %v710
  %v944 = vadd.f32 %v940, %v711
  %v945 = vadd.f32 %v941, %v712
  %v946 = vadd.f32 %v942, %v929
  %v947 = vadd.f32 %v943, %v930
  %v948 = vadd.f32 %v944, %v931
  %v949 = vadd.f32 %v945, %v932
  %v950 = vmax.f32 %v270, %v489
  %v951 = vmax.f32 %v271, %v490
  %v952 = vmax.f32 %v272, %v491
  %v953 = vmax.f32 %v273, %v492
  %v954 = vmax.f32 %v950, %v709
  %v955 = vmax.f32 %v951, %v710
  %v956 = vmax.f32 %v952, %v711
  %v957 = vmax.f32 %v953, %v712
  %v958 = vmax.f32 %v954, %v929
  %v959 = vmax.f32 %v955, %v930
  %v960 = vmax.f32 %v956, %v931
  %v961 = vmax.f32 %v957, %v932
  %v962 = vadd.f32 %v274, %v270
  %v963 = vadd.f32 %v275, %v271
  %v964 = vadd.f32 %v276, %v272
  %v965 = vadd.f32 %v277, %v273
  %v966 = vadd.f32 %v494, %v489
  %v967 = vadd.f32 %v495, %v490
  %v968 = vadd.f32 %v496, %v491
  %v969 = vadd.f32 %v497, %v492
  %v970 = vadd.f32 %v714, %v709
  %v971 = vadd.f32 %v715, %v710
  %v972 = vadd.f32 %v716, %v711
  %v973 = vadd.f32 %v717, %v712
  %v974 = vadd.f32 %v934, %v929
  %v975 = vadd.f32 %v935, %v930
  %v976 = vadd.f32 %v936, %v931
  %v977 = vadd.f32 %v937, %v932
  %v978 = vmax.f32 %v962, %v966
  %v979 = vmax.f32 %v963, %v967
  %v980 = vmax.f32 %v964, %v968
  %v981 = vmax.f32 %v965, %v969
  %v982 = vmax.f32 %v274, %v494
  %v983 = vmax.f32 %v275, %v495
  %v984 = vmax.f32 %v276, %v496
  %v985 = vmax.f32 %v277, %v497
  %v986 = vmax.f32 %v978, %v970
  %v987 = vmax.f32 %v979, %v971
  %v988 = vmax.f32 %v980, %v972
  %v989 = vmax.f32 %v981, %v973
  %v990 = vmax.f32 %v982, %v714
  %v991 = vmax.f32 %v983, %v715
  %v992 = vmax.f32 %v984, %v716
  %v993 = vmax.f32 %v985, %v717
  %v994 = vmax.f32 %v986, %v974
  %v995 = vmax.f32 %v987, %v975
  %v996 = vmax.f32 %v988, %v976
  %v997 = vmax.f32 %v989, %v977
  %v998 = vmax.f32 %v990, %v934
  %v999 = vmax.f32 %v991, %v935
  %v1000 = vmax.f32 %v992, %v936
  %v1001 = vmax.f32 %v993, %v937
  %v1002 = vsub.f32 %v962, %v994
  %v1003 = vsub.f32 %v963, %v995
  %v1004 = vsub.f32 %v964, %v996
  %v1005 = vsub.f32 %v965, %v997
  %v1006 = vmul.f32 %v1002, 1.442695
  %v1007 = vpow.pop %v1006
  %v1008 = vmul.f32 %v1003, 1.442695
  %v1009 = vpow.pop %v1008
  %v1010 = vmul.f32 %v1004, 1.442695
  %v1011 = vpow.pop %v1010
  %v1012 = vmul.f32 %v1005, 1.442695
  %v1013 = vpow.pop %v1012
  %v1014 = vsub.f32 %v274, %v998
  %v1015 = vsub.f32 %v275, %v999
  %v1016 = vsub.f32 %v276, %v1000
  %v1017 = vsub.f32 %v277, %v1001
  %v1018 = vmul.f32 %v1014, 1.442695
  %v1019 = vpow.pop %v1018
  %v1020 = vmul.f32 %v1015, 1.442695
  %v1021 = vpow.pop %v1020
  %v1022 = vmul.f32 %v1016, 1.442695
  %v1023 = vpow.pop %v1022
  %v1024 = vmul.f32 %v1017, 1.442695
  %v1025 = vpow.pop %v1024
  %v1026 = vsub.f32 %v966, %v994
  %v1027 = vsub.f32 %v967, %v995
  %v1028 = vsub.f32 %v968, %v996
  %v1029 = vsub.f32 %v969, %v997
  %v1030 = vmul.f32 %v1026, 1.442695
  %v1031 = vpow.pop %v1030
  %v1032 = vmul.f32 %v1027, 1.442695
  %v1033 = vpow.pop %v1032
  %v1034 = vmul.f32 %v1028, 1.442695
  %v1035 = vpow.pop %v1034
  %v1036 = vmul.f32 %v1029, 1.442695
  %v1037 = vpow.pop %v1036
  %v1038 = vadd.f32 %v1007, %v1031
  %v1039 = vadd.f32 %v1009, %v1033
  %v1040 = vadd.f32 %v1011, %v1035
  %v1041 = vadd.f32 %v1013, %v1037
  %v1042 = vsub.f32 %v494, %v998
  %v1043 = vsub.f32 %v495, %v999
  %v1044 = vsub.f32 %v496, %v1000
  %v1045 = vsub.f32 %v497, %v1001
  %v1046 = vmul.f32 %v1042, 1.442695
  %v1047 = vpow.pop %v1046
  %v1048 = vmul.f32 %v1043, 1.442695
  %v1049 = vpow.pop %v1048
  %v1050 = vmul.f32 %v1044, 1.442695
  %v1051 = vpow.pop %v1050
  %v1052 = vmul.f32 %v1045, 1.442695
  %v1053 = vpow.pop %v1052
  %v1054 = vadd.f32 %v1019, %v1047
  %v1055 = vadd.f32 %v1021, %v1049
  %v1056 = vadd.f32 %v1023, %v1051
  %v1057 = vadd.f32 %v1025, %v1053
  %v1058 = vsub.f32 %v970, %v994
  %v1059 = vsub.f32 %v971, %v995
  %v1060 = vsub.f32 %v972, %v996
  %v1061 = vsub.f32 %v973, %v997
  %v1062 = vmul.f32 %v1058, 1.442695
  %v1063 = vpow.pop %v1062
  %v1064 = vmul.f32 %v1059, 1.442695
  %v1065 = vpow.pop %v1064
  %v1066 = vmul.f32 %v1060, 1.442695
  %v1067 = vpow.pop %v1066
  %v1068 = vmul.f32 %v1061, 1.442695
  %v1069 = vpow.pop %v1068
  %v1070 = vadd.f32 %v1038, %v1063
  %v1071 = vadd.f32 %v1039, %v1065
  %v1072 = vadd.f32 %v1040, %v1067
  %v1073 = vadd.f32 %v1041, %v1069
  %v1074 = vsub.f32 %v714, %v998
  %v1075 = vsub.f32 %v715, %v999
  %v1076 = vsub.f32 %v716, %v1000
  %v1077 = vsub.f32 %v717, %v1001
  %v1078 = vmul.f32 %v1074, 1.442695
  %v1079 = vpow.pop %v1078
  %v1080 = vmul.f32 %v1075, 1.442695
  %v1081 = vpow.pop %v1080
  %v1082 = vmul.f32 %v1076, 1.442695
  %v1083 = vpow.pop %v1082
  %v1084 = vmul.f32 %v1077, 1.442695
  %v1085 = vpow.pop %v1084
  %v1086 = vadd.f32 %v1054, %v1079
  %v1087 = vadd.f32 %v1055, %v1081
  %v1088 = vadd.f32 %v1056, %v1083
  %v1089 = vadd.f32 %v1057, %v1085
  %v1090 = vsub.f32 %v974, %v994
  %v1091 = vsub.f32 %v975, %v995
  %v1092 = vsub.f32 %v976, %v996
  %v1093 = vsub.f32 %v977, %v997
  %v1094 = vmul.f32 %v1090, 1.442695
  %v1095 = vpow.pop %v1094
  %v1096 = vmul.f32 %v1091, 1.442695
  %v1097 = vpow.pop %v1096
  %v1098 = vmul.f32 %v1092, 1.442695
  %v1099 = vpow.pop %v1098
  %v1100 = vmul.f32 %v1093, 1.442695
  %v1101 = vpow.pop %v1100
  %v1102 = vadd.f32 %v1070, %v1095
  %v1103 = vadd.f32 %v1071, %v1097
  %v1104 = vadd.f32 %v1072, %v1099
  %v1105 = vadd.f32 %v1073, %v1101
  %v1106 = vsub.f32 %v934, %v998
  %v1107 = vsub.f32 %v935, %v999
  %v1108 = vsub.f32 %v936, %v1000
  %v1109 = vsub.f32 %v937, %v1001
  %v1110 = vmul.f32 %v1106, 1.442695
  %v1111 = vpow.pop %v1110
  %v1112 = vmul.f32 %v1107, 1.442695
  %v1113 = vpow.pop %v1112
  %v1114 = vmul.f32 %v1108, 1.442695
  %v1115 = vpow.pop %v1114
  %v1116 = vmul.f32 %v1109, 1.442695
  %v1117 = vpow.pop %v1116
  %v1118 = vadd.f32 %v1086, %v1111
  %v1119 = vadd.f32 %v1087, %v1113
  %v1120 = vadd.f32 %v1088, %v1115
  %v1121 = vadd.f32 %v1089, %v1117
  %v1122 = vlog2.pop %v1102
  %v1123 = vmul.f32 %v1122, 0.6931472
  %v1124 = vlog2.pop %v1103
  %v1125 = vmul.f32 %v1124, 0.6931472
  %v1126 = vlog2.pop %v1104
  %v1127 = vmul.f32 %v1126, 0.6931472
  %v1128 = vlog2.pop %v1105
  %v1129 = vmul.f32 %v1128, 0.6931472
  %v1130 = vadd.f32 %v994, %v1123
  %v1131 = vadd.f32 %v995, %v1125
  %v1132 = vadd.f32 %v996, %v1127
  %v1133 = vadd.f32 %v997, %v1129
  %v1134 = vlog2.pop %v1118
  %v1135 = vmul.f32 %v1134, 0.6931472
  %v1136 = vlog2.pop %v1119
  %v1137 = vmul.f32 %v1136, 0.6931472
  %v1138 = vlog2.pop %v1120
  %v1139 = vmul.f32 %v1138, 0.6931472
  %v1140 = vlog2.pop %v1121
  %v1141 = vmul.f32 %v1140, 0.6931472
  %v1142 = vadd.f32 %v998, %v1135
  %v1143 = vadd.f32 %v999, %v1137
  %v1144 = vadd.f32 %v1000, %v1139
  %v1145 = vadd.f32 %v1001, %v1141
  %v1146 = vsub.f32 %v1130, %v1142
  %v1147 = vsub.f32 %v1131, %v1143
  %v1148 = vsub.f32 %v1132, %v1144
  %v1149 = vsub.f32 %v1133, %v1145
  %v1150 = vsel %vm57, %v946, 0.0
  %v1151 = vsel %vm58, %v947, 0.0
  %v1152 = vsel %vm59, %v948, 0.0
  %v1153 = vsel %vm60, %v949, 0.0
  %v1154 = vadd.f32 %v1150, %v1151
  %v1155 = vadd.f32 %v1154, %v1152
  %v1156 = vadd.f32 %v1155, %v1153
  %1157 = vadd.xlane.f32.xlu0 %v1156
  %v1158 = vpop.xlane.xlu0 %1157
  %v1159 = vrot.slane %v1158, 4
  %v1160 = vadd.f32 %v1158, %v1159
  %v1161 = vrot.slane %v1160, 2
  %v1162 = vadd.f32 %v1160, %v1161
  %v1163 = vrot.slane %v1162, 1
  %v1164 = vadd.f32 %v1162, %v1163
  %s1165 = vtos %v1164
  %v1166 = vsel %vm57, %v958, 0.0
  %v1167 = vsel %vm58, %v959, 0.0
  %v1168 = vsel %vm59, %v960, 0.0
  %v1169 = vsel %vm60, %v961, 0.0
  %v1170 = vadd.f32 %v1166, %v1167
  %v1171 = vadd.f32 %v1170, %v1168
  %v1172 = vadd.f32 %v1171, %v1169
  %1173 = vadd.xlane.f32.xlu0 %v1172
  %v1174 = vpop.xlane.xlu0 %1173
  %v1175 = vrot.slane %v1174, 4
  %v1176 = vadd.f32 %v1174, %v1175
  %v1177 = vrot.slane %v1176, 2
  %v1178 = vadd.f32 %v1176, %v1177
  %v1179 = vrot.slane %v1178, 1
  %v1180 = vadd.f32 %v1178, %v1179
  %s1181 = vtos %v1180
  %v1182 = vsel %vm57, %v1146, 0.0
  %v1183 = vsel %vm58, %v1147, 0.0
  %v1184 = vsel %vm59, %v1148, 0.0
  %v1185 = vsel %vm60, %v1149, 0.0
  %v1186 = vadd.f32 %v1182, %v1183
  %v1187 = vadd.f32 %v1186, %v1184
  %v1188 = vadd.f32 %v1187, %v1185
  %1189 = vadd.xlane.f32.xlu0 %v1188
  %v1190 = vpop.xlane.xlu0 %1189
  %v1191 = vrot.slane %v1190, 4
  %v1192 = vadd.f32 %v1190, %v1191
  %v1193 = vrot.slane %v1192, 2
  %v1194 = vadd.f32 %v1192, %v1193
  %v1195 = vrot.slane %v1194, 1
  %v1196 = vadd.f32 %v1194, %v1195
  %s1197 = vtos %v1196
  %v1198 = vstv %s1165
  %1199 = vst [vmem:[%s4] sm:$0xff] %v1198
  %v1200 = vstv %s1181
  %s1201 = scalar_lea.vmem %s4, 8
  %1202 = vst [vmem:[%s1201] sm:$0xff] %v1200
  %v1203 = vstv %s1197
  %s1204 = scalar_lea.vmem %s4, 16
  %1205 = vst [vmem:[%s1204] sm:$0xff] %v1203
  // Predicated region
  $region18: #{rwta_mb_loss.1} parent=0 // pred_check
    _
  $region19: #{rwta_mb_loss.1} parent=0 // pred_check_branch
    %1207 = sbr.rel (0) target = $region21
  $region20: #{rwta_mb_loss.1} parent=0 // pred_region
    _
  $region21: #{rwta_mb_loss.1} parent=0 // pred_fallthru
    _
  // Predicated region
  $region22: #{rwta_mb_loss.1} parent=0 // pred_check
    _
  $region23: #{rwta_mb_loss.1} parent=0 // pred_check_branch
    %1209 = sbr.rel (0) target = $region25
  $region24: #{rwta_mb_loss.1} parent=0 // pred_region
    _
  $region25: #{rwta_mb_loss.1} parent=0 // pred_fallthru
    _

</llo_original>
